<compile_context>
chip_gen: v7x
topology: tpu7x:2x2x1
jax: 0.10.0
libtpu: 0.0.40
codegen_flags: <defaults>
</compile_context>

<pallas_src>
import functools
import math

import jax
import jax.numpy as jnp
from jax import lax
from jax.experimental import pallas as pl
from jax.experimental.pallas import tpu as pltpu


def _layernorm(v, g, b, eps=1e-5):
    mu = jnp.mean(v, axis=-1, keepdims=True)
    var = jnp.mean((v - mu) ** 2, axis=-1, keepdims=True)
    return (v - mu) * lax.rsqrt(var + eps) * g + b


def _gelu_exact(v):
    # matches torch.nn.GELU() default (erf-based, approximate='none')
    return 0.5 * v * (1.0 + lax.erf(v * (1.0 / math.sqrt(2.0))))


def att_layer_kernel(
    xq_ref, xkv_ref, mask_ref,
    wq_ref, wkv_ref, wlin_ref, ln_g_ref, ln_b_ref,
    norm_g_ref, norm_b_ref, w1_ref, n1_g_ref, n1_b_ref,
    w2_ref, n2_g_ref, n2_b_ref,
    out_ref,
    att_ref,                      # VMEM scratch: (block_b * block_q, d) f32
    *, n_head, n_factor, fast_att, mxu_dtype,
):
    bt, tq, d = xq_ref.shape
    n = xkv_ref.shape[1]
    f = n_factor

    def mm(a, w):
        # MXU matmul, optional bf16 operands, always f32 accumulation.
        return jnp.dot(a.astype(mxu_dtype), w.astype(mxu_dtype),
                       preferred_element_type=jnp.float32)

    xq = xq_ref[...].astype(jnp.float32).reshape(bt * tq, d)    # query rows
    xkv = xkv_ref[...].astype(jnp.float32).reshape(bt * n, d)   # all rows (K/V)

    # ---- FastMultiHeadAttention ----
    # 1/sqrt(n_factor) is folded into wq at init time.
    q_all = mm(xq, wq_ref[...])          # (bt*tq, d)
    kv_all = mm(xkv, wkv_ref[...])       # (bt*n, 2d)  -> K | V

    for b_i in range(bt):
        mask = mask_ref[b_i].astype(jnp.float32)          # (tq, n)
        q_rows = q_all[b_i * tq:(b_i + 1) * tq]           # (tq, d)
        k_rows = kv_all[b_i * n:(b_i + 1) * n, :d]        # (n, d)
        v_rows = kv_all[b_i * n:(b_i + 1) * n, d:]        # (n, d)
        for h in range(n_head):
            lo = h * f
            q_h = q_rows[:, lo:lo + f]                    # (tq, f) static slice
            k_h = k_rows[:, lo:lo + f]                    # (n, f)
            v_h = v_rows[:, lo:lo + f]                    # (n, f)
            # q_h @ k_h^T without materializing a transpose.
            s = lax.dot_general(
                q_h.astype(mxu_dtype), k_h.astype(mxu_dtype),
                (((1,), (1,)), ((), ())),
                preferred_element_type=jnp.float32)       # (tq, n)
            if fast_att:
                s = s - mask
            else:
                s = mask * s - 10.0 * (1.0 - mask)
            s = s - jnp.max(s, axis=-1, keepdims=True)
            p = jnp.exp(s)
            p = p * pl.reciprocal(jnp.sum(p, axis=-1, keepdims=True), approx=True)
            if not fast_att:
                p = p * mask
            # Write this head's output directly into the accumulator slab.
            att_ref[b_i * tq:(b_i + 1) * tq, lo:lo + f] = jnp.dot(
                p.astype(mxu_dtype), v_h.astype(mxu_dtype),
                preferred_element_type=jnp.float32)

    att = mm(att_ref[...], wlin_ref[...])                 # single wide matmul
    y = _layernorm(xq + att, ln_g_ref[...], ln_b_ref[...])

    # ---- ConvBloc1d ----
    nodes = _layernorm(y, norm_g_ref[...], norm_b_ref[...])
    t = _gelu_exact(_layernorm(mm(nodes, w1_ref[...]), n1_g_ref[...], n1_b_ref[...]))
    nodes = nodes + t
    t = _gelu_exact(_layernorm(mm(nodes, w2_ref[...]), n2_g_ref[...], n2_b_ref[...]))
    nodes = nodes + t

    out_ref[...] = nodes.reshape(bt, tq, d).astype(out_ref.dtype)


def att_layer(x, mask, params, *, n_head, fast_att,
              block_b=1, block_q=None, mxu_dtype=jnp.float32):
    """x: (b, n, d) f32; mask: (b, n, n) f32; dist unused (n_head > 1)."""
    b, n, d = x.shape
    assert d % n_head == 0
    n_factor = d // n_head
    if block_q is None:
        block_q = n
    assert b % block_b == 0 and n % block_q == 0
    assert block_q == n or block_q % 8 == 0
    grid = (b // block_b, n // block_q)

    kern = functools.partial(
        att_layer_kernel, n_head=n_head, n_factor=n_factor,
        fast_att=fast_att, mxu_dtype=mxu_dtype)

    weight_args = (
        params["wq"], params["wkv"], params["wlin"],
        params["ln_g"], params["ln_b"],
        params["norm_g"], params["norm_b"],
        params["w1"], params["n1_g"], params["n1_b"],
        params["w2"], params["n2_g"], params["n2_b"],
    )

    def wspec(w):
        return pl.BlockSpec(w.shape, lambda bi, qi: (0, 0))

    grid_spec = pltpu.PrefetchScalarGridSpec(
        num_scalar_prefetch=0,
        grid=grid,
        in_specs=[
            pl.BlockSpec((block_b, block_q, d), lambda bi, qi: (bi, qi, 0)),  # x (query rows)
            pl.BlockSpec((block_b, n, d), lambda bi, qi: (bi, 0, 0)),         # x (K/V rows)
            pl.BlockSpec((block_b, block_q, n), lambda bi, qi: (bi, qi, 0)),  # mask
        ] + [wspec(w) for w in weight_args],
        out_specs=pl.BlockSpec((block_b, block_q, d), lambda bi, qi: (bi, qi, 0)),
        scratch_shapes=[pltpu.VMEM((block_b * block_q, d), jnp.float32)],
    )

    return pl.pallas_call(
        kern,
        out_shape=jax.ShapeDtypeStruct((b, n, d), x.dtype),
        grid_spec=grid_spec,
        compiler_params=pltpu.CompilerParams(
            dimension_semantics=("parallel", "parallel")),
    )(x, x, mask, *weight_args)


def _xavier_uniform(key, out_dim, in_dim):
    # torch xavier_uniform_ on a (out, in) Linear weight; return transposed
    # (in, out) so the kernel computes y = x @ W.
    limit = math.sqrt(6.0 / (in_dim + out_dim))
    w = jax.random.uniform(
        key, (out_dim, in_dim), jnp.float32, minval=-limit, maxval=limit)
    return w.T


def make_params(key, d, n_head):
    n_factor = d // n_head
    keys = jax.random.split(key, 6)
    ones = jnp.ones((1, d), jnp.float32)
    zeros = jnp.zeros((1, d), jnp.float32)
    wq = _xavier_uniform(keys[0], d, d) / math.sqrt(n_factor)   # fold Q scale
    wk = _xavier_uniform(keys[1], d, d)
    wv = _xavier_uniform(keys[2], d, d)
    return {
        "wq": wq,
        "wkv": jnp.concatenate([wk, wv], axis=1),   # (d, 2d) fused K|V weight
        "wlin": _xavier_uniform(keys[3], d, d),
        "ln_g": ones, "ln_b": zeros,       # att1.ln
        "norm_g": ones, "norm_b": zeros,   # conv1.norm
        "w1": _xavier_uniform(keys[4], d, d),
        "n1_g": ones, "n1_b": zeros,       # conv1.norm1
        "w2": _xavier_uniform(keys[5], d, d),
        "n2_g": ones, "n2_b": zeros,       # conv1.norm2
    }


def att_layer_ref(x, mask, params, *, n_head, fast_att):
    """Pure-JAX reference mirroring the PyTorch module (for validation)."""
    b, n, d = x.shape
    f = d // n_head
    wk, wv = params["wkv"][:, :d], params["wkv"][:, d:]
    Q = (x @ params["wq"]).reshape(b, n, n_head, f).transpose(0, 2, 1, 3)
    K = (x @ wk).reshape(b, n, n_head, f).transpose(0, 2, 1, 3)
    V = (x @ wv).reshape(b, n, n_head, f).transpose(0, 2, 1, 3)
    s = jnp.einsum('bhqf,bhkf->bhqk', Q, K)
    m = mask[:, None]
    if fast_att:
        p = jax.nn.softmax(s - m, axis=-1)
    else:
        p = jax.nn.softmax(m * s - 10.0 * (1.0 - m), axis=-1) * m
    att = jnp.einsum('bhqk,bhkf->bhqf', p, V)
    att = att.transpose(0, 2, 1, 3).reshape(b, n, d) @ params["wlin"]

    def ln(v, g, bb):
        mu = v.mean(-1, keepdims=True)
        var = ((v - mu) ** 2).mean(-1, keepdims=True)
        return (v - mu) / jnp.sqrt(var + 1e-5) * g + bb

    y = ln(x + att, params["ln_g"], params["ln_b"])
    nodes = ln(y, params["norm_g"], params["norm_b"])
    t = jax.nn.gelu(ln(nodes @ params["w1"], params["n1_g"], params["n1_b"]),
                    approximate=False)
    nodes = nodes + t
    t = jax.nn.gelu(ln(nodes @ params["w2"], params["n2_g"], params["n2_b"]),
                    approximate=False)
    return nodes + t


if __name__ == "__main__":
    B, N, D = 2, 8, 32
    N_HEAD = 4
    FAST_ATT = True

    root = jax.random.PRNGKey(0)
    kx, kmask, kp = jax.random.split(root, 3)

    x = jax.random.normal(kx, (B, N, D), jnp.float32)
    # additive mask for fast_att=True: 0 for visible, large value for masked
    mask = jnp.where(
        jax.random.uniform(kmask, (B, N, N)) > 0.3, 0.0, 1e4
    ).astype(jnp.float32)
    # dist is unused when n_head > 1 in the reference module.

    params = make_params(kp, D, N_HEAD)

    out = att_layer(x, mask, params, n_head=N_HEAD, fast_att=FAST_ATT)
    out = jax.block_until_ready(out)
    assert out.shape == (B, N, D)

    ref = att_layer_ref(x, mask, params, n_head=N_HEAD, fast_att=FAST_ATT)
    assert jnp.allclose(out, ref, atol=2e-2, rtol=2e-2), float(
        jnp.max(jnp.abs(out - ref)))
    print("KERNEL_OK")
</pallas_src>

<mosaic_0001>
module attributes {stable_mosaic.version = 11 : i64} {
  func.func @att_layer_kernel(%arg0: i32, %arg1: i32, %arg2: memref<1x8x32xf32, #tpu.memory_space<vmem>>, %arg3: memref<1x8x32xf32, #tpu.memory_space<vmem>>, %arg4: memref<1x8x8xf32, #tpu.memory_space<vmem>>, %arg5: memref<32x32xf32, #tpu.memory_space<vmem>>, %arg6: memref<32x64xf32, #tpu.memory_space<vmem>>, %arg7: memref<32x32xf32, #tpu.memory_space<vmem>>, %arg8: memref<1x32xf32, #tpu.memory_space<vmem>>, %arg9: memref<1x32xf32, #tpu.memory_space<vmem>>, %arg10: memref<1x32xf32, #tpu.memory_space<vmem>>, %arg11: memref<1x32xf32, #tpu.memory_space<vmem>>, %arg12: memref<32x32xf32, #tpu.memory_space<vmem>>, %arg13: memref<1x32xf32, #tpu.memory_space<vmem>>, %arg14: memref<1x32xf32, #tpu.memory_space<vmem>>, %arg15: memref<32x32xf32, #tpu.memory_space<vmem>>, %arg16: memref<1x32xf32, #tpu.memory_space<vmem>>, %arg17: memref<1x32xf32, #tpu.memory_space<vmem>>, %arg18: memref<1x8x32xf32, #tpu.memory_space<vmem>>, %arg19: memref<8x32xf32, #tpu.memory_space<vmem>>) attributes {dimension_semantics = [#tpu.dimension_semantics<parallel>, #tpu.dimension_semantics<parallel>], iteration_bounds = array<i64: 2, 1>, scalar_prefetch = 0 : i64, scratch_operands = 1 : i64, tpu.core_type = #tpu.core_type<tc>, window_params = [{transform_indices = @transform_0, window_bounds = array<i64: 1, 8, 32>}, {transform_indices = @transform_1, window_bounds = array<i64: 1, 8, 32>}, {transform_indices = @transform_2, window_bounds = array<i64: 1, 8, 8>}, {pipeline_mode = #tpu.pipeline_mode<synchronous>, transform_indices = @transform_3, window_bounds = array<i64: 32, 32>}, {pipeline_mode = #tpu.pipeline_mode<synchronous>, transform_indices = @transform_4, window_bounds = array<i64: 32, 64>}, {pipeline_mode = #tpu.pipeline_mode<synchronous>, transform_indices = @transform_5, window_bounds = array<i64: 32, 32>}, {pipeline_mode = #tpu.pipeline_mode<synchronous>, transform_indices = @transform_6, window_bounds = array<i64: 1, 32>}, {pipeline_mode = #tpu.pipeline_mode<synchronous>, transform_indices = @transform_7, window_bounds = array<i64: 1, 32>}, {pipeline_mode = #tpu.pipeline_mode<synchronous>, transform_indices = @transform_8, window_bounds = array<i64: 1, 32>}, {pipeline_mode = #tpu.pipeline_mode<synchronous>, transform_indices = @transform_9, window_bounds = array<i64: 1, 32>}, {pipeline_mode = #tpu.pipeline_mode<synchronous>, transform_indices = @transform_10, window_bounds = array<i64: 32, 32>}, {pipeline_mode = #tpu.pipeline_mode<synchronous>, transform_indices = @transform_11, window_bounds = array<i64: 1, 32>}, {pipeline_mode = #tpu.pipeline_mode<synchronous>, transform_indices = @transform_12, window_bounds = array<i64: 1, 32>}, {pipeline_mode = #tpu.pipeline_mode<synchronous>, transform_indices = @transform_13, window_bounds = array<i64: 32, 32>}, {pipeline_mode = #tpu.pipeline_mode<synchronous>, transform_indices = @transform_14, window_bounds = array<i64: 1, 32>}, {pipeline_mode = #tpu.pipeline_mode<synchronous>, transform_indices = @transform_15, window_bounds = array<i64: 1, 32>}, {transform_indices = @transform_16, window_bounds = array<i64: 1, 8, 32>}]} {
    %c0 = arith.constant 0 : index
    %c0_0 = arith.constant 0 : index
    %c0_1 = arith.constant 0 : index
    %0 = vector.load %arg2[%c0, %c0_0, %c0_1] : memref<1x8x32xf32, #tpu.memory_space<vmem>>, vector<1x8x32xf32>
    %1 = vector.shape_cast %0 : vector<1x8x32xf32> to vector<8x32xf32>
    %c0_2 = arith.constant 0 : index
    %c0_3 = arith.constant 0 : index
    %c0_4 = arith.constant 0 : index
    %2 = vector.load %arg3[%c0_2, %c0_3, %c0_4] : memref<1x8x32xf32, #tpu.memory_space<vmem>>, vector<1x8x32xf32>
    %3 = vector.shape_cast %2 : vector<1x8x32xf32> to vector<8x32xf32>
    %c0_5 = arith.constant 0 : index
    %c0_6 = arith.constant 0 : index
    %4 = vector.load %arg5[%c0_5, %c0_6] : memref<32x32xf32, #tpu.memory_space<vmem>>, vector<32x32xf32>
    %cst = arith.constant dense<0.000000e+00> : vector<8x32xf32>
    %5 = tpu.matmul %1, %4, %cst {dimension_numbers = #tpu.dot_dimension_numbers<[1], [0], [0], [1], [0, 0, 1, 1], [], []>} : vector<8x32xf32>, vector<32x32xf32>, vector<8x32xf32> -> vector<8x32xf32>
    %c0_7 = arith.constant 0 : index
    %c0_8 = arith.constant 0 : index
    %6 = vector.load %arg6[%c0_7, %c0_8] : memref<32x64xf32, #tpu.memory_space<vmem>>, vector<32x64xf32>
    %cst_9 = arith.constant dense<0.000000e+00> : vector<8x64xf32>
    %7 = tpu.matmul %3, %6, %cst_9 {dimension_numbers = #tpu.dot_dimension_numbers<[1], [0], [0], [1], [0, 0, 1, 1], [], []>} : vector<8x32xf32>, vector<32x64xf32>, vector<8x64xf32> -> vector<8x64xf32>
    %c0_10 = arith.constant 0 : index
    %c0_11 = arith.constant 0 : index
    %c0_12 = arith.constant 0 : index
    %8 = vector.load %arg4[%c0_10, %c0_11, %c0_12] : memref<1x8x8xf32, #tpu.memory_space<vmem>>, vector<1x8x8xf32>
    %9 = vector.shape_cast %8 : vector<1x8x8xf32> to vector<8x8xf32>
    %10 = vector.extract_strided_slice %7 {offsets = [0, 0], sizes = [8, 32], strides = [1, 1]} : vector<8x64xf32> to vector<8x32xf32>
    %11 = vector.extract_strided_slice %7 {offsets = [0, 32], sizes = [8, 32], strides = [1, 1]} : vector<8x64xf32> to vector<8x32xf32>
    %12 = vector.extract_strided_slice %5 {offsets = [0, 0], sizes = [8, 8], strides = [1, 1]} : vector<8x32xf32> to vector<8x8xf32>
    %13 = vector.extract_strided_slice %10 {offsets = [0, 0], sizes = [8, 8], strides = [1, 1]} : vector<8x32xf32> to vector<8x8xf32>
    %14 = vector.extract_strided_slice %11 {offsets = [0, 0], sizes = [8, 8], strides = [1, 1]} : vector<8x32xf32> to vector<8x8xf32>
    %cst_13 = arith.constant dense<0.000000e+00> : vector<8x8xf32>
    %15 = tpu.matmul %12, %13, %cst_13 {dimension_numbers = #tpu.dot_dimension_numbers<[1], [1], [0], [0], [0, 0, 1, 0], [], []>} : vector<8x8xf32>, vector<8x8xf32>, vector<8x8xf32> -> vector<8x8xf32>
    %16 = arith.subf %15, %9 : vector<8x8xf32>
    %cst_14 = arith.constant dense<0xFF800000> : vector<8xf32>
    %17 = vector.multi_reduction <maximumf>, %16, %cst_14 [1] : vector<8x8xf32> to vector<8xf32>
    %18 = vector.shape_cast %17 : vector<8xf32> to vector<8x1xf32>
    %19 = vector.broadcast %18 : vector<8x1xf32> to vector<8x8xf32>
    %20 = arith.subf %16, %19 : vector<8x8xf32>
    %21 = math.exp %20 : vector<8x8xf32>
    %cst_15 = arith.constant dense<0.000000e+00> : vector<8xf32>
    %22 = vector.multi_reduction <add>, %21, %cst_15 [1] : vector<8x8xf32> to vector<8xf32>
    %23 = vector.shape_cast %22 : vector<8xf32> to vector<8x1xf32>
    %24 = tpu.reciprocal %23 {approx = true} : vector<8x1xf32> -> vector<8x1xf32>
    %25 = vector.broadcast %24 : vector<8x1xf32> to vector<8x8xf32>
    %26 = arith.mulf %21, %25 : vector<8x8xf32>
    %cst_16 = arith.constant dense<0.000000e+00> : vector<8x8xf32>
    %27 = tpu.matmul %26, %14, %cst_16 {dimension_numbers = #tpu.dot_dimension_numbers<[1], [0], [0], [1], [0, 0, 1, 1], [], []>} : vector<8x8xf32>, vector<8x8xf32>, vector<8x8xf32> -> vector<8x8xf32>
    %c0_17 = arith.constant 0 : index
    %c0_18 = arith.constant 0 : index
    %28 = vector.load %arg19[%c0_17, %c0_18] : memref<8x32xf32, #tpu.memory_space<vmem>>, vector<8x8xf32>
    tpu.vector_store %arg19[%c0_17, %c0_18], %27 {strides = array<i32>} : memref<8x32xf32, #tpu.memory_space<vmem>>, vector<8x8xf32>,
    %29 = vector.extract_strided_slice %5 {offsets = [0, 8], sizes = [8, 8], strides = [1, 1]} : vector<8x32xf32> to vector<8x8xf32>
    %30 = vector.extract_strided_slice %10 {offsets = [0, 8], sizes = [8, 8], strides = [1, 1]} : vector<8x32xf32> to vector<8x8xf32>
    %31 = vector.extract_strided_slice %11 {offsets = [0, 8], sizes = [8, 8], strides = [1, 1]} : vector<8x32xf32> to vector<8x8xf32>
    %cst_19 = arith.constant dense<0.000000e+00> : vector<8x8xf32>
    %32 = tpu.matmul %29, %30, %cst_19 {dimension_numbers = #tpu.dot_dimension_numbers<[1], [1], [0], [0], [0, 0, 1, 0], [], []>} : vector<8x8xf32>, vector<8x8xf32>, vector<8x8xf32> -> vector<8x8xf32>
    %33 = arith.subf %32, %9 : vector<8x8xf32>
    %cst_20 = arith.constant dense<0xFF800000> : vector<8xf32>
    %34 = vector.multi_reduction <maximumf>, %33, %cst_20 [1] : vector<8x8xf32> to vector<8xf32>
    %35 = vector.shape_cast %34 : vector<8xf32> to vector<8x1xf32>
    %36 = vector.broadcast %35 : vector<8x1xf32> to vector<8x8xf32>
    %37 = arith.subf %33, %36 : vector<8x8xf32>
    %38 = math.exp %37 : vector<8x8xf32>
    %cst_21 = arith.constant dense<0.000000e+00> : vector<8xf32>
    %39 = vector.multi_reduction <add>, %38, %cst_21 [1] : vector<8x8xf32> to vector<8xf32>
    %40 = vector.shape_cast %39 : vector<8xf32> to vector<8x1xf32>
    %41 = tpu.reciprocal %40 {approx = true} : vector<8x1xf32> -> vector<8x1xf32>
    %42 = vector.broadcast %41 : vector<8x1xf32> to vector<8x8xf32>
    %43 = arith.mulf %38, %42 : vector<8x8xf32>
    %cst_22 = arith.constant dense<0.000000e+00> : vector<8x8xf32>
    %44 = tpu.matmul %43, %31, %cst_22 {dimension_numbers = #tpu.dot_dimension_numbers<[1], [0], [0], [1], [0, 0, 1, 1], [], []>} : vector<8x8xf32>, vector<8x8xf32>, vector<8x8xf32> -> vector<8x8xf32>
    %c0_23 = arith.constant 0 : index
    %c8 = arith.constant 8 : index
    %45 = vector.load %arg19[%c0_23, %c8] : memref<8x32xf32, #tpu.memory_space<vmem>>, vector<8x8xf32>
    tpu.vector_store %arg19[%c0_23, %c8], %44 {strides = array<i32>} : memref<8x32xf32, #tpu.memory_space<vmem>>, vector<8x8xf32>,
    %46 = vector.extract_strided_slice %5 {offsets = [0, 16], sizes = [8, 8], strides = [1, 1]} : vector<8x32xf32> to vector<8x8xf32>
    %47 = vector.extract_strided_slice %10 {offsets = [0, 16], sizes = [8, 8], strides = [1, 1]} : vector<8x32xf32> to vector<8x8xf32>
    %48 = vector.extract_strided_slice %11 {offsets = [0, 16], sizes = [8, 8], strides = [1, 1]} : vector<8x32xf32> to vector<8x8xf32>
    %cst_24 = arith.constant dense<0.000000e+00> : vector<8x8xf32>
    %49 = tpu.matmul %46, %47, %cst_24 {dimension_numbers = #tpu.dot_dimension_numbers<[1], [1], [0], [0], [0, 0, 1, 0], [], []>} : vector<8x8xf32>, vector<8x8xf32>, vector<8x8xf32> -> vector<8x8xf32>
    %50 = arith.subf %49, %9 : vector<8x8xf32>
    %cst_25 = arith.constant dense<0xFF800000> : vector<8xf32>
    %51 = vector.multi_reduction <maximumf>, %50, %cst_25 [1] : vector<8x8xf32> to vector<8xf32>
    %52 = vector.shape_cast %51 : vector<8xf32> to vector<8x1xf32>
    %53 = vector.broadcast %52 : vector<8x1xf32> to vector<8x8xf32>
    %54 = arith.subf %50, %53 : vector<8x8xf32>
    %55 = math.exp %54 : vector<8x8xf32>
    %cst_26 = arith.constant dense<0.000000e+00> : vector<8xf32>
    %56 = vector.multi_reduction <add>, %55, %cst_26 [1] : vector<8x8xf32> to vector<8xf32>
    %57 = vector.shape_cast %56 : vector<8xf32> to vector<8x1xf32>
    %58 = tpu.reciprocal %57 {approx = true} : vector<8x1xf32> -> vector<8x1xf32>
    %59 = vector.broadcast %58 : vector<8x1xf32> to vector<8x8xf32>
    %60 = arith.mulf %55, %59 : vector<8x8xf32>
    %cst_27 = arith.constant dense<0.000000e+00> : vector<8x8xf32>
    %61 = tpu.matmul %60, %48, %cst_27 {dimension_numbers = #tpu.dot_dimension_numbers<[1], [0], [0], [1], [0, 0, 1, 1], [], []>} : vector<8x8xf32>, vector<8x8xf32>, vector<8x8xf32> -> vector<8x8xf32>
    %c0_28 = arith.constant 0 : index
    %c16 = arith.constant 16 : index
    %62 = vector.load %arg19[%c0_28, %c16] : memref<8x32xf32, #tpu.memory_space<vmem>>, vector<8x8xf32>
    tpu.vector_store %arg19[%c0_28, %c16], %61 {strides = array<i32>} : memref<8x32xf32, #tpu.memory_space<vmem>>, vector<8x8xf32>,
    %63 = vector.extract_strided_slice %5 {offsets = [0, 24], sizes = [8, 8], strides = [1, 1]} : vector<8x32xf32> to vector<8x8xf32>
    %64 = vector.extract_strided_slice %10 {offsets = [0, 24], sizes = [8, 8], strides = [1, 1]} : vector<8x32xf32> to vector<8x8xf32>
    %65 = vector.extract_strided_slice %11 {offsets = [0, 24], sizes = [8, 8], strides = [1, 1]} : vector<8x32xf32> to vector<8x8xf32>
    %cst_29 = arith.constant dense<0.000000e+00> : vector<8x8xf32>
    %66 = tpu.matmul %63, %64, %cst_29 {dimension_numbers = #tpu.dot_dimension_numbers<[1], [1], [0], [0], [0, 0, 1, 0], [], []>} : vector<8x8xf32>, vector<8x8xf32>, vector<8x8xf32> -> vector<8x8xf32>
    %67 = arith.subf %66, %9 : vector<8x8xf32>
    %cst_30 = arith.constant dense<0xFF800000> : vector<8xf32>
    %68 = vector.multi_reduction <maximumf>, %67, %cst_30 [1] : vector<8x8xf32> to vector<8xf32>
    %69 = vector.shape_cast %68 : vector<8xf32> to vector<8x1xf32>
    %70 = vector.broadcast %69 : vector<8x1xf32> to vector<8x8xf32>
    %71 = arith.subf %67, %70 : vector<8x8xf32>
    %72 = math.exp %71 : vector<8x8xf32>
    %cst_31 = arith.constant dense<0.000000e+00> : vector<8xf32>
    %73 = vector.multi_reduction <add>, %72, %cst_31 [1] : vector<8x8xf32> to vector<8xf32>
    %74 = vector.shape_cast %73 : vector<8xf32> to vector<8x1xf32>
    %75 = tpu.reciprocal %74 {approx = true} : vector<8x1xf32> -> vector<8x1xf32>
    %76 = vector.broadcast %75 : vector<8x1xf32> to vector<8x8xf32>
    %77 = arith.mulf %72, %76 : vector<8x8xf32>
    %cst_32 = arith.constant dense<0.000000e+00> : vector<8x8xf32>
    %78 = tpu.matmul %77, %65, %cst_32 {dimension_numbers = #tpu.dot_dimension_numbers<[1], [0], [0], [1], [0, 0, 1, 1], [], []>} : vector<8x8xf32>, vector<8x8xf32>, vector<8x8xf32> -> vector<8x8xf32>
    %c0_33 = arith.constant 0 : index
    %c24 = arith.constant 24 : index
    %79 = vector.load %arg19[%c0_33, %c24] : memref<8x32xf32, #tpu.memory_space<vmem>>, vector<8x8xf32>
    tpu.vector_store %arg19[%c0_33, %c24], %78 {strides = array<i32>} : memref<8x32xf32, #tpu.memory_space<vmem>>, vector<8x8xf32>,
    %c0_34 = arith.constant 0 : index
    %c0_35 = arith.constant 0 : index
    %80 = vector.load %arg19[%c0_34, %c0_35] : memref<8x32xf32, #tpu.memory_space<vmem>>, vector<8x32xf32>
    %c0_36 = arith.constant 0 : index
    %c0_37 = arith.constant 0 : index
    %81 = vector.load %arg7[%c0_36, %c0_37] : memref<32x32xf32, #tpu.memory_space<vmem>>, vector<32x32xf32>
    %cst_38 = arith.constant dense<0.000000e+00> : vector<8x32xf32>
    %82 = tpu.matmul %80, %81, %cst_38 {dimension_numbers = #tpu.dot_dimension_numbers<[1], [0], [0], [1], [0, 0, 1, 1], [], []>} : vector<8x32xf32>, vector<32x32xf32>, vector<8x32xf32> -> vector<8x32xf32>
    %83 = arith.addf %1, %82 : vector<8x32xf32>
    %c0_39 = arith.constant 0 : index
    %c0_40 = arith.constant 0 : index
    %84 = vector.load %arg8[%c0_39, %c0_40] : memref<1x32xf32, #tpu.memory_space<vmem>>, vector<1x32xf32>
    %c0_41 = arith.constant 0 : index
    %c0_42 = arith.constant 0 : index
    %85 = vector.load %arg9[%c0_41, %c0_42] : memref<1x32xf32, #tpu.memory_space<vmem>>, vector<1x32xf32>
    %cst_43 = arith.constant dense<0.000000e+00> : vector<8xf32>
    %86 = vector.multi_reduction <add>, %83, %cst_43 [1] : vector<8x32xf32> to vector<8xf32>
    %87 = vector.shape_cast %86 : vector<8xf32> to vector<8x1xf32>
    %cst_44 = arith.constant 3.200000e+01 : f32
    %88 = vector.broadcast %cst_44 : f32 to vector<8x1xf32>
    %89 = arith.divf %87, %88 : vector<8x1xf32>
    %90 = vector.broadcast %89 : vector<8x1xf32> to vector<8x32xf32>
    %91 = arith.subf %83, %90 : vector<8x32xf32>
    %92 = arith.mulf %91, %91 : vector<8x32xf32>
    %cst_45 = arith.constant dense<0.000000e+00> : vector<8xf32>
    %93 = vector.multi_reduction <add>, %92, %cst_45 [1] : vector<8x32xf32> to vector<8xf32>
    %94 = vector.shape_cast %93 : vector<8xf32> to vector<8x1xf32>
    %cst_46 = arith.constant 3.200000e+01 : f32
    %95 = vector.broadcast %cst_46 : f32 to vector<8x1xf32>
    %96 = arith.divf %94, %95 : vector<8x1xf32>
    %97 = vector.broadcast %89 : vector<8x1xf32> to vector<8x32xf32>
    %98 = arith.subf %83, %97 : vector<8x32xf32>
    %cst_47 = arith.constant 9.99999974E-6 : f32
    %99 = vector.broadcast %cst_47 : f32 to vector<8x1xf32>
    %100 = arith.addf %96, %99 : vector<8x1xf32>
    %101 = math.rsqrt %100 : vector<8x1xf32>
    %102 = vector.broadcast %101 : vector<8x1xf32> to vector<8x32xf32>
    %103 = arith.mulf %98, %102 : vector<8x32xf32>
    %104 = vector.broadcast %84 : vector<1x32xf32> to vector<8x32xf32>
    %105 = arith.mulf %103, %104 : vector<8x32xf32>
    %106 = vector.broadcast %85 : vector<1x32xf32> to vector<8x32xf32>
    %107 = arith.addf %105, %106 : vector<8x32xf32>
    %c0_48 = arith.constant 0 : index
    %c0_49 = arith.constant 0 : index
    %108 = vector.load %arg10[%c0_48, %c0_49] : memref<1x32xf32, #tpu.memory_space<vmem>>, vector<1x32xf32>
    %c0_50 = arith.constant 0 : index
    %c0_51 = arith.constant 0 : index
    %109 = vector.load %arg11[%c0_50, %c0_51] : memref<1x32xf32, #tpu.memory_space<vmem>>, vector<1x32xf32>
    %cst_52 = arith.constant dense<0.000000e+00> : vector<8xf32>
    %110 = vector.multi_reduction <add>, %107, %cst_52 [1] : vector<8x32xf32> to vector<8xf32>
    %111 = vector.shape_cast %110 : vector<8xf32> to vector<8x1xf32>
    %cst_53 = arith.constant 3.200000e+01 : f32
    %112 = vector.broadcast %cst_53 : f32 to vector<8x1xf32>
    %113 = arith.divf %111, %112 : vector<8x1xf32>
    %114 = vector.broadcast %113 : vector<8x1xf32> to vector<8x32xf32>
    %115 = arith.subf %107, %114 : vector<8x32xf32>
    %116 = arith.mulf %115, %115 : vector<8x32xf32>
    %cst_54 = arith.constant dense<0.000000e+00> : vector<8xf32>
    %117 = vector.multi_reduction <add>, %116, %cst_54 [1] : vector<8x32xf32> to vector<8xf32>
    %118 = vector.shape_cast %117 : vector<8xf32> to vector<8x1xf32>
    %cst_55 = arith.constant 3.200000e+01 : f32
    %119 = vector.broadcast %cst_55 : f32 to vector<8x1xf32>
    %120 = arith.divf %118, %119 : vector<8x1xf32>
    %121 = vector.broadcast %113 : vector<8x1xf32> to vector<8x32xf32>
    %122 = arith.subf %107, %121 : vector<8x32xf32>
    %cst_56 = arith.constant 9.99999974E-6 : f32
    %123 = vector.broadcast %cst_56 : f32 to vector<8x1xf32>
    %124 = arith.addf %120, %123 : vector<8x1xf32>
    %125 = math.rsqrt %124 : vector<8x1xf32>
    %126 = vector.broadcast %125 : vector<8x1xf32> to vector<8x32xf32>
    %127 = arith.mulf %122, %126 : vector<8x32xf32>
    %128 = vector.broadcast %108 : vector<1x32xf32> to vector<8x32xf32>
    %129 = arith.mulf %127, %128 : vector<8x32xf32>
    %130 = vector.broadcast %109 : vector<1x32xf32> to vector<8x32xf32>
    %131 = arith.addf %129, %130 : vector<8x32xf32>
    %c0_57 = arith.constant 0 : index
    %c0_58 = arith.constant 0 : index
    %132 = vector.load %arg12[%c0_57, %c0_58] : memref<32x32xf32, #tpu.memory_space<vmem>>, vector<32x32xf32>
    %cst_59 = arith.constant dense<0.000000e+00> : vector<8x32xf32>
    %133 = tpu.matmul %131, %132, %cst_59 {dimension_numbers = #tpu.dot_dimension_numbers<[1], [0], [0], [1], [0, 0, 1, 1], [], []>} : vector<8x32xf32>, vector<32x32xf32>, vector<8x32xf32> -> vector<8x32xf32>
    %c0_60 = arith.constant 0 : index
    %c0_61 = arith.constant 0 : index
    %134 = vector.load %arg13[%c0_60, %c0_61] : memref<1x32xf32, #tpu.memory_space<vmem>>, vector<1x32xf32>
    %c0_62 = arith.constant 0 : index
    %c0_63 = arith.constant 0 : index
    %135 = vector.load %arg14[%c0_62, %c0_63] : memref<1x32xf32, #tpu.memory_space<vmem>>, vector<1x32xf32>
    %cst_64 = arith.constant dense<0.000000e+00> : vector<8xf32>
    %136 = vector.multi_reduction <add>, %133, %cst_64 [1] : vector<8x32xf32> to vector<8xf32>
    %137 = vector.shape_cast %136 : vector<8xf32> to vector<8x1xf32>
    %cst_65 = arith.constant 3.200000e+01 : f32
    %138 = vector.broadcast %cst_65 : f32 to vector<8x1xf32>
    %139 = arith.divf %137, %138 : vector<8x1xf32>
    %140 = vector.broadcast %139 : vector<8x1xf32> to vector<8x32xf32>
    %141 = arith.subf %133, %140 : vector<8x32xf32>
    %142 = arith.mulf %141, %141 : vector<8x32xf32>
    %cst_66 = arith.constant dense<0.000000e+00> : vector<8xf32>
    %143 = vector.multi_reduction <add>, %142, %cst_66 [1] : vector<8x32xf32> to vector<8xf32>
    %144 = vector.shape_cast %143 : vector<8xf32> to vector<8x1xf32>
    %cst_67 = arith.constant 3.200000e+01 : f32
    %145 = vector.broadcast %cst_67 : f32 to vector<8x1xf32>
    %146 = arith.divf %144, %145 : vector<8x1xf32>
    %147 = vector.broadcast %139 : vector<8x1xf32> to vector<8x32xf32>
    %148 = arith.subf %133, %147 : vector<8x32xf32>
    %cst_68 = arith.constant 9.99999974E-6 : f32
    %149 = vector.broadcast %cst_68 : f32 to vector<8x1xf32>
    %150 = arith.addf %146, %149 : vector<8x1xf32>
    %151 = math.rsqrt %150 : vector<8x1xf32>
    %152 = vector.broadcast %151 : vector<8x1xf32> to vector<8x32xf32>
    %153 = arith.mulf %148, %152 : vector<8x32xf32>
    %154 = vector.broadcast %134 : vector<1x32xf32> to vector<8x32xf32>
    %155 = arith.mulf %153, %154 : vector<8x32xf32>
    %156 = vector.broadcast %135 : vector<1x32xf32> to vector<8x32xf32>
    %157 = arith.addf %155, %156 : vector<8x32xf32>
    %cst_69 = arith.constant 5.000000e-01 : f32
    %158 = vector.broadcast %cst_69 : f32 to vector<8x32xf32>
    %159 = arith.mulf %158, %157 : vector<8x32xf32>
    %cst_70 = arith.constant 0.707106769 : f32
    %160 = vector.broadcast %cst_70 : f32 to vector<8x32xf32>
    %161 = arith.mulf %157, %160 : vector<8x32xf32>
    %162 = math.erf %161 : vector<8x32xf32>
    %cst_71 = arith.constant 1.000000e+00 : f32
    %163 = vector.broadcast %cst_71 : f32 to vector<8x32xf32>
    %164 = arith.addf %163, %162 : vector<8x32xf32>
    %165 = arith.mulf %159, %164 : vector<8x32xf32>
    %166 = arith.addf %131, %165 : vector<8x32xf32>
    %c0_72 = arith.constant 0 : index
    %c0_73 = arith.constant 0 : index
    %167 = vector.load %arg15[%c0_72, %c0_73] : memref<32x32xf32, #tpu.memory_space<vmem>>, vector<32x32xf32>
    %cst_74 = arith.constant dense<0.000000e+00> : vector<8x32xf32>
    %168 = tpu.matmul %166, %167, %cst_74 {dimension_numbers = #tpu.dot_dimension_numbers<[1], [0], [0], [1], [0, 0, 1, 1], [], []>} : vector<8x32xf32>, vector<32x32xf32>, vector<8x32xf32> -> vector<8x32xf32>
    %c0_75 = arith.constant 0 : index
    %c0_76 = arith.constant 0 : index
    %169 = vector.load %arg16[%c0_75, %c0_76] : memref<1x32xf32, #tpu.memory_space<vmem>>, vector<1x32xf32>
    %c0_77 = arith.constant 0 : index
    %c0_78 = arith.constant 0 : index
    %170 = vector.load %arg17[%c0_77, %c0_78] : memref<1x32xf32, #tpu.memory_space<vmem>>, vector<1x32xf32>
    %cst_79 = arith.constant dense<0.000000e+00> : vector<8xf32>
    %171 = vector.multi_reduction <add>, %168, %cst_79 [1] : vector<8x32xf32> to vector<8xf32>
    %172 = vector.shape_cast %171 : vector<8xf32> to vector<8x1xf32>
    %cst_80 = arith.constant 3.200000e+01 : f32
    %173 = vector.broadcast %cst_80 : f32 to vector<8x1xf32>
    %174 = arith.divf %172, %173 : vector<8x1xf32>
    %175 = vector.broadcast %174 : vector<8x1xf32> to vector<8x32xf32>
    %176 = arith.subf %168, %175 : vector<8x32xf32>
    %177 = arith.mulf %176, %176 : vector<8x32xf32>
    %cst_81 = arith.constant dense<0.000000e+00> : vector<8xf32>
    %178 = vector.multi_reduction <add>, %177, %cst_81 [1] : vector<8x32xf32> to vector<8xf32>
    %179 = vector.shape_cast %178 : vector<8xf32> to vector<8x1xf32>
    %cst_82 = arith.constant 3.200000e+01 : f32
    %180 = vector.broadcast %cst_82 : f32 to vector<8x1xf32>
    %181 = arith.divf %179, %180 : vector<8x1xf32>
    %182 = vector.broadcast %174 : vector<8x1xf32> to vector<8x32xf32>
    %183 = arith.subf %168, %182 : vector<8x32xf32>
    %cst_83 = arith.constant 9.99999974E-6 : f32
    %184 = vector.broadcast %cst_83 : f32 to vector<8x1xf32>
    %185 = arith.addf %181, %184 : vector<8x1xf32>
    %186 = math.rsqrt %185 : vector<8x1xf32>
    %187 = vector.broadcast %186 : vector<8x1xf32> to vector<8x32xf32>
    %188 = arith.mulf %183, %187 : vector<8x32xf32>
    %189 = vector.broadcast %169 : vector<1x32xf32> to vector<8x32xf32>
    %190 = arith.mulf %188, %189 : vector<8x32xf32>
    %191 = vector.broadcast %170 : vector<1x32xf32> to vector<8x32xf32>
    %192 = arith.addf %190, %191 : vector<8x32xf32>
    %cst_84 = arith.constant 5.000000e-01 : f32
    %193 = vector.broadcast %cst_84 : f32 to vector<8x32xf32>
    %194 = arith.mulf %193, %192 : vector<8x32xf32>
    %cst_85 = arith.constant 0.707106769 : f32
    %195 = vector.broadcast %cst_85 : f32 to vector<8x32xf32>
    %196 = arith.mulf %192, %195 : vector<8x32xf32>
    %197 = math.erf %196 : vector<8x32xf32>
    %cst_86 = arith.constant 1.000000e+00 : f32
    %198 = vector.broadcast %cst_86 : f32 to vector<8x32xf32>
    %199 = arith.addf %198, %197 : vector<8x32xf32>
    %200 = arith.mulf %194, %199 : vector<8x32xf32>
    %201 = arith.addf %166, %200 : vector<8x32xf32>
    %202 = vector.shape_cast %201 : vector<8x32xf32> to vector<1x8x32xf32>
    %c0_87 = arith.constant 0 : index
    %c0_88 = arith.constant 0 : index
    %c0_89 = arith.constant 0 : index
    %203 = vector.load %arg18[%c0_87, %c0_88, %c0_89] : memref<1x8x32xf32, #tpu.memory_space<vmem>>, vector<1x8x32xf32>
    tpu.vector_store %arg18[%c0_87, %c0_88, %c0_89], %202 {strides = array<i32>} : memref<1x8x32xf32, #tpu.memory_space<vmem>>, vector<1x8x32xf32>,
    return
  }
  func.func @transform_0(%arg0: i32, %arg1: i32) -> (i32, i32, i32) {
    %c0_i32 = arith.constant 0 : i32
    %c0_i32_0 = arith.constant 0 : i32
    return %arg0, %arg1, %c0_i32 : i32, i32, i32
  }
  func.func @transform_1(%arg0: i32, %arg1: i32) -> (i32, i32, i32) {
    %c0_i32 = arith.constant 0 : i32
    %c0_i32_0 = arith.constant 0 : i32
    %c0_i32_1 = arith.constant 0 : i32
    return %arg0, %c0_i32, %c0_i32_0 : i32, i32, i32
  }
  func.func @transform_2(%arg0: i32, %arg1: i32) -> (i32, i32, i32) {
    %c0_i32 = arith.constant 0 : i32
    %c0_i32_0 = arith.constant 0 : i32
    return %arg0, %arg1, %c0_i32 : i32, i32, i32
  }
  func.func @transform_3(%arg0: i32, %arg1: i32) -> (i32, i32) {
    %c0_i32 = arith.constant 0 : i32
    %c0_i32_0 = arith.constant 0 : i32
    %c0_i32_1 = arith.constant 0 : i32
    return %c0_i32, %c0_i32_0 : i32, i32
  }
  func.func @transform_4(%arg0: i32, %arg1: i32) -> (i32, i32) {
    %c0_i32 = arith.constant 0 : i32
    %c0_i32_0 = arith.constant 0 : i32
    %c0_i32_1 = arith.constant 0 : i32
    return %c0_i32, %c0_i32_0 : i32, i32
  }
  func.func @transform_5(%arg0: i32, %arg1: i32) -> (i32, i32) {
    %c0_i32 = arith.constant 0 : i32
    %c0_i32_0 = arith.constant 0 : i32
    %c0_i32_1 = arith.constant 0 : i32
    return %c0_i32, %c0_i32_0 : i32, i32
  }
  func.func @transform_6(%arg0: i32, %arg1: i32) -> (i32, i32) {
    %c0_i32 = arith.constant 0 : i32
    %c0_i32_0 = arith.constant 0 : i32
    %c0_i32_1 = arith.constant 0 : i32
    return %c0_i32, %c0_i32_0 : i32, i32
  }
  func.func @transform_7(%arg0: i32, %arg1: i32) -> (i32, i32) {
    %c0_i32 = arith.constant 0 : i32
    %c0_i32_0 = arith.constant 0 : i32
    %c0_i32_1 = arith.constant 0 : i32
    return %c0_i32, %c0_i32_0 : i32, i32
  }
  func.func @transform_8(%arg0: i32, %arg1: i32) -> (i32, i32) {
    %c0_i32 = arith.constant 0 : i32
    %c0_i32_0 = arith.constant 0 : i32
    %c0_i32_1 = arith.constant 0 : i32
    return %c0_i32, %c0_i32_0 : i32, i32
  }
  func.func @transform_9(%arg0: i32, %arg1: i32) -> (i32, i32) {
    %c0_i32 = arith.constant 0 : i32
    %c0_i32_0 = arith.constant 0 : i32
    %c0_i32_1 = arith.constant 0 : i32
    return %c0_i32, %c0_i32_0 : i32, i32
  }
  func.func @transform_10(%arg0: i32, %arg1: i32) -> (i32, i32) {
    %c0_i32 = arith.constant 0 : i32
    %c0_i32_0 = arith.constant 0 : i32
    %c0_i32_1 = arith.constant 0 : i32
    return %c0_i32, %c0_i32_0 : i32, i32
  }
  func.func @transform_11(%arg0: i32, %arg1: i32) -> (i32, i32) {
    %c0_i32 = arith.constant 0 : i32
    %c0_i32_0 = arith.constant 0 : i32
    %c0_i32_1 = arith.constant 0 : i32
    return %c0_i32, %c0_i32_0 : i32, i32
  }
  func.func @transform_12(%arg0: i32, %arg1: i32) -> (i32, i32) {
    %c0_i32 = arith.constant 0 : i32
    %c0_i32_0 = arith.constant 0 : i32
    %c0_i32_1 = arith.constant 0 : i32
    return %c0_i32, %c0_i32_0 : i32, i32
  }
  func.func @transform_13(%arg0: i32, %arg1: i32) -> (i32, i32) {
    %c0_i32 = arith.constant 0 : i32
    %c0_i32_0 = arith.constant 0 : i32
    %c0_i32_1 = arith.constant 0 : i32
    return %c0_i32, %c0_i32_0 : i32, i32
  }
  func.func @transform_14(%arg0: i32, %arg1: i32) -> (i32, i32) {
    %c0_i32 = arith.constant 0 : i32
    %c0_i32_0 = arith.constant 0 : i32
    %c0_i32_1 = arith.constant 0 : i32
    return %c0_i32, %c0_i32_0 : i32, i32
  }
  func.func @transform_15(%arg0: i32, %arg1: i32) -> (i32, i32) {
    %c0_i32 = arith.constant 0 : i32
    %c0_i32_0 = arith.constant 0 : i32
    %c0_i32_1 = arith.constant 0 : i32
    return %c0_i32, %c0_i32_0 : i32, i32
  }
  func.func @transform_16(%arg0: i32, %arg1: i32) -> (i32, i32, i32) {
    %c0_i32 = arith.constant 0 : i32
    %c0_i32_0 = arith.constant 0 : i32
    return %arg0, %arg1, %c0_i32 : i32, i32, i32
  }
}

</mosaic_0001>

<llo_original>
// kernel: tpu_custom_call.1
$region0: #{tpu_custom_call.1}
  #allocation0 [shape = 'u32[]', space=smem, size = 0x4, offset = 0x4, fixed_abs, tag = 'smem constant byte address 0x4 - core index']
  #allocation1 [shape = 'u32[144,128]{1,0:T(1,128)}', space=vmem, size = 0x12000, scoped, tag = 'internal scratch']
  #allocation2 [shape = 'f32[8,32]{1,0:T(8,128)}', space=vmem, size = 0x1000, scoped, tag = 'scratch operand']
  %s0 = inlined_call_operand.hbm [shape: f32[2,8,32], index: 0, kind: input, shape index: {}]
  %s1 = inlined_call_operand.hbm [shape: f32[2,8,32], index: 1, kind: input, shape index: {}]
  %s2 = inlined_call_operand.hbm [shape: f32[2,8,8], index: 2, kind: input, shape index: {}]
  %s3 = inlined_call_operand.hbm [shape: f32[32,32], index: 3, kind: input, shape index: {}]
  %s4 = inlined_call_operand.hbm [shape: f32[32,64], index: 4, kind: input, shape index: {}]
  %s5 = inlined_call_operand.hbm [shape: f32[32,32], index: 5, kind: input, shape index: {}]
  %s6 = inlined_call_operand.vmem [shape: f32[1,32], index: 6, kind: input, shape index: {}]
  %s7 = inlined_call_operand.vmem [shape: f32[1,32], index: 7, kind: input, shape index: {}]
  %s8 = inlined_call_operand.vmem [shape: f32[1,32], index: 8, kind: input, shape index: {}]
  %s9 = inlined_call_operand.vmem [shape: f32[1,32], index: 9, kind: input, shape index: {}]
  %s10 = inlined_call_operand.vmem [shape: f32[32,32], index: 10, kind: input, shape index: {}]
  %s11 = inlined_call_operand.vmem [shape: f32[1,32], index: 11, kind: input, shape index: {}]
  %s12 = inlined_call_operand.vmem [shape: f32[1,32], index: 12, kind: input, shape index: {}]
  %s13 = inlined_call_operand.hbm [shape: f32[32,32], index: 13, kind: input, shape index: {}]
  %s14 = inlined_call_operand.vmem [shape: f32[1,32], index: 14, kind: input, shape index: {}]
  %s15 = inlined_call_operand.vmem [shape: f32[1,32], index: 15, kind: input, shape index: {}]
  %s16 = inlined_call_operand.hbm [shape: f32[2,8,32], index: 16, kind: output, shape index: {}]
  %s17 = sld [smem:[#allocation0]]
  $region125: #{tpu_custom_call.1} parent=0
    _
  %s19 = ssub.s32 1, %s17
  %s20 = scalar_select 0, %s19, %s17
  $region1: #{tpu_custom_call.1} parent=0
    #allocation3 [shape = 'u8[8192]{0}', space=vmem, size = 0x2000, scoped, tag = 'input window, operand 0']
    #allocation4 [shape = 's32[2]{0}', space=sflag, size = 0x8, scoped, tag = 'scoped memory for tpu_custom_call.1']
    #allocation5 [shape = 's32[2]{0}', space=sflag, size = 0x8, scoped, tag = 'scoped memory for tpu_custom_call.1']
    #allocation6 [shape = 'u8[8192]{0}', space=vmem, size = 0x2000, scoped, tag = 'input window, operand 1']
    #allocation7 [shape = 's32[2]{0}', space=sflag, size = 0x8, scoped, tag = 'scoped memory for tpu_custom_call.1']
    #allocation8 [shape = 'u8[8192]{0}', space=vmem, size = 0x2000, scoped, tag = 'input window, operand 2']
    #allocation9 [shape = 'u8[16384]{0}', space=vmem, size = 0x4000, scoped, tag = 'input window, operand 3, single buffered']
    #allocation10 [shape = 's32[1]{0}', space=sflag, size = 0x4, scoped, tag = 'scoped memory for tpu_custom_call.1']
    #allocation11 [shape = 'u8[16384]{0}', space=vmem, size = 0x4000, scoped, tag = 'input window, operand 4, single buffered']
    #allocation12 [shape = 'u8[16384]{0}', space=vmem, size = 0x4000, scoped, tag = 'input window, operand 5, single buffered']
    #allocation13 [shape = 's32[1]{0}', space=sflag, size = 0x4, scoped, tag = 'scoped memory for tpu_custom_call.1']
    #allocation14 [shape = 'u8[16384]{0}', space=vmem, size = 0x4000, scoped, tag = 'input window, operand 13, single buffered']
    #allocation15 [shape = 'u8[8192]{0}', space=vmem, size = 0x2000, scoped, tag = 'output window, operand 0']
    %21 = vsyncpa [#allocation4], 0
    %s22 = scalar_lea.sflag [#allocation4], 1
    %23 = vsyncpa %s22, 0
    %24 = vsyncpa [#allocation7], 0
    %s25 = scalar_lea.sflag [#allocation7], 1
    %26 = vsyncpa %s25, 0
    %27 = vsyncpa [#allocation10], 0
    %28 = vsyncpa [#allocation13], 0
    %29 = vsyncpa [#allocation5], 0
    %s30 = scalar_lea.sflag [#allocation5], 1
    %31 = vsyncpa %s30, 0
    loop: start=0, step=1, limit=4
    $region2: #{tpu_custom_call.1} parent=1 // loop_pre_header
      _
    $region3: #{tpu_custom_call.1} parent=1 // loop_header
      %s33 = sphi 0, %s37
      %p34 = scmp.ge.s32.totalorder %s33, 4
      %s40 = sphi 0, %s52
      %s41 = sphi 0, %s48
      %s42 = sphi 0, %s40
      %s43 = sphi 0, %s41
      %s44 = sphi 0, %s42
      %s45 = sphi 0, %s43
      %s57 = sphi 0, %s59
      %s60 = sphi 0, %s57
      %s61 = sphi 0, %s60
      %s77 = sphi 0, %s61
      %s83 = sphi 0, %s85
      %s86 = sphi 0, %s83
      %s87 = sphi 0, %s86
      %s103 = sphi 0, %s87
      %s111 = sphi 0, %s113
      %s114 = sphi 0, %s111
      %s115 = sphi 0, %s114
      %s131 = sphi 0, %s115
      %s135 = sphi 0, %s135
      %s137 = sphi 0, %s135
      %s138 = sphi 0, %s137
      %s152 = sphi 0, %s138
      %s156 = sphi 0, %s156
      %s158 = sphi 0, %s156
      %s159 = sphi 0, %s158
      %s173 = sphi 0, %s159
      %s177 = sphi 0, %s177
      %s179 = sphi 0, %s177
      %s180 = sphi 0, %s179
      %s194 = sphi 0, %s180
      %s198 = sphi 0, %s198
      %s200 = sphi 0, %s198
      %s201 = sphi 0, %s200
      %s215 = sphi 0, %s201
      %s219 = sphi 0, %s219
      %s221 = sphi 0, %s219
      %s222 = sphi 0, %s221
      %s236 = sphi 0, %s222
      %s240 = sphi 0, %s240
      %s242 = sphi 0, %s240
      %s243 = sphi 0, %s242
      %s257 = sphi 0, %s243
      %s261 = sphi 0, %s261
      %s263 = sphi 0, %s261
      %s264 = sphi 0, %s263
      %s278 = sphi 0, %s264
      %s282 = sphi 0, %s282
      %s284 = sphi 0, %s282
      %s285 = sphi 0, %s284
      %s299 = sphi 0, %s285
      %s303 = sphi 0, %s303
      %s305 = sphi 0, %s303
      %s306 = sphi 0, %s305
      %s320 = sphi 0, %s306
      %s324 = sphi 0, %s324
      %s326 = sphi 0, %s324
      %s327 = sphi 0, %s326
      %s341 = sphi 0, %s327
      %s345 = sphi 0, %s345
      %s347 = sphi 0, %s345
      %s348 = sphi 0, %s347
      %s362 = sphi 0, %s348
      %s366 = sphi 0, %s366
      %s368 = sphi 0, %s366
      %s369 = sphi 0, %s368
      %s383 = sphi 0, %s369
      %s387 = sphi 0, %s387
      %s389 = sphi 0, %s387
      %s390 = sphi 0, %s389
      %s404 = sphi 0, %s390
      %s412 = sphi 0, %s414
      %s415 = sphi 0, %s412
      %s416 = sphi 0, %s415
      %s432 = sphi 0, %s416
    $region4: #{tpu_custom_call.1} parent=1 // loop_header_branch
      %36 = sbr.rel (%p34) target = $region8
    $region5: #{tpu_custom_call.1} parent=1 // loop_body
      %s38 = ssub.s32 %s33, 1
      %s39 = ssub.s32 %s33, 2
      %s46 = sadd.s32 1, %s41
      %p47 = scmp.ge.s32.totalorder %s46, 1
      %s48 = scalar_select %p47, 0, %s46
      %s49 = sadd.s32 1, %s40
      %s50 = scalar_select %p47, %s49, %s40
      %p51 = scmp.ge.s32.totalorder %s50, 2
      %s52 = scalar_select %p51, 0, %s50
      %s53 = ssub.s32 %s40, %s52
      %s54 = ssub.s32 %s41, %s48
      %s55 = sor.u32 %s53, %s54
      %p56 = scmp.eq.s32.totalorder %s55, 0
      %s58 = sadd.s32 %s57, 1
      %s59 = scalar_select %p56, %s57, %s58
      %p62 = pneg %p56
      %p63 = scmp.eq.s32.totalorder %s33, 1
      %p64 = por %p62, %p63
      %p65 = scmp.ne.s32.totalorder %s57, %s60
      %p66 = scmp.eq.s32.totalorder %s33, 0
      %p67 = por %p65, %p66
      %p68 = scmp.ne.s32.totalorder %s57, %s60
      %p69 = scmp.eq.s32.totalorder %s38, 1
      %p70 = por %p68, %p69
      %p71 = scmp.ne.s32.totalorder %s60, %s61
      %p72 = scmp.eq.s32.totalorder %s38, 0
      %p73 = por %p71, %p72
      %p74 = scmp.ne.s32.totalorder %s60, %s61
      %p75 = scmp.eq.s32.totalorder %s39, 1
      %p76 = por %p74, %p75
      %p78 = scmp.ne.s32.totalorder %s61, %s77
      %p79 = scmp.eq.s32.totalorder %s39, 0
      %p80 = por %p78, %p79
      %s81 = ssub.s32 %s40, %s52
      %p82 = scmp.eq.s32.totalorder %s81, 0
      %s84 = sadd.s32 %s83, 1
      %s85 = scalar_select %p82, %s83, %s84
      %p88 = pneg %p82
      %p89 = scmp.eq.s32.totalorder %s33, 1
      %p90 = por %p88, %p89
      %p91 = scmp.ne.s32.totalorder %s83, %s86
      %p92 = scmp.eq.s32.totalorder %s33, 0
      %p93 = por %p91, %p92
      %p94 = scmp.ne.s32.totalorder %s83, %s86
      %p95 = scmp.eq.s32.totalorder %s38, 1
      %p96 = por %p94, %p95
      %p97 = scmp.ne.s32.totalorder %s86, %s87
      %p98 = scmp.eq.s32.totalorder %s38, 0
      %p99 = por %p97, %p98
      %p100 = scmp.ne.s32.totalorder %s86, %s87
      %p101 = scmp.eq.s32.totalorder %s39, 1
      %p102 = por %p100, %p101
      %p104 = scmp.ne.s32.totalorder %s87, %s103
      %p105 = scmp.eq.s32.totalorder %s39, 0
      %p106 = por %p104, %p105
      %s107 = ssub.s32 %s40, %s52
      %s108 = ssub.s32 %s41, %s48
      %s109 = sor.u32 %s107, %s108
      %p110 = scmp.eq.s32.totalorder %s109, 0
      %s112 = sadd.s32 %s111, 1
      %s113 = scalar_select %p110, %s111, %s112
      %p116 = pneg %p110
      %p117 = scmp.eq.s32.totalorder %s33, 1
      %p118 = por %p116, %p117
      %p119 = scmp.ne.s32.totalorder %s111, %s114
      %p120 = scmp.eq.s32.totalorder %s33, 0
      %p121 = por %p119, %p120
      %p122 = scmp.ne.s32.totalorder %s111, %s114
      %p123 = scmp.eq.s32.totalorder %s38, 1
      %p124 = por %p122, %p123
      %p125 = scmp.ne.s32.totalorder %s114, %s115
      %p126 = scmp.eq.s32.totalorder %s38, 0
      %p127 = por %p125, %p126
      %p128 = scmp.ne.s32.totalorder %s114, %s115
      %p129 = scmp.eq.s32.totalorder %s39, 1
      %p130 = por %p128, %p129
      %p132 = scmp.ne.s32.totalorder %s115, %s131
      %p133 = scmp.eq.s32.totalorder %s39, 0
      %p134 = por %p132, %p133
      %s136 = sadd.s32 %s135, 1
      %p139 = scmp.eq.s32.totalorder %s33, 1
      %p140 = scmp.ne.s32.totalorder %s135, %s137
      %p141 = scmp.eq.s32.totalorder %s33, 0
      %p142 = por %p140, %p141
      %p143 = scmp.ne.s32.totalorder %s135, %s137
      %p144 = scmp.eq.s32.totalorder %s38, 1
      %p145 = por %p143, %p144
      %p146 = scmp.ne.s32.totalorder %s137, %s138
      %p147 = scmp.eq.s32.totalorder %s38, 0
      %p148 = por %p146, %p147
      %p149 = scmp.ne.s32.totalorder %s137, %s138
      %p150 = scmp.eq.s32.totalorder %s39, 1
      %p151 = por %p149, %p150
      %p153 = scmp.ne.s32.totalorder %s138, %s152
      %p154 = scmp.eq.s32.totalorder %s39, 0
      %p155 = por %p153, %p154
      %s157 = sadd.s32 %s156, 1
      %p160 = scmp.eq.s32.totalorder %s33, 1
      %p161 = scmp.ne.s32.totalorder %s156, %s158
      %p162 = scmp.eq.s32.totalorder %s33, 0
      %p163 = por %p161, %p162
      %p164 = scmp.ne.s32.totalorder %s156, %s158
      %p165 = scmp.eq.s32.totalorder %s38, 1
      %p166 = por %p164, %p165
      %p167 = scmp.ne.s32.totalorder %s158, %s159
      %p168 = scmp.eq.s32.totalorder %s38, 0
      %p169 = por %p167, %p168
      %p170 = scmp.ne.s32.totalorder %s158, %s159
      %p171 = scmp.eq.s32.totalorder %s39, 1
      %p172 = por %p170, %p171
      %p174 = scmp.ne.s32.totalorder %s159, %s173
      %p175 = scmp.eq.s32.totalorder %s39, 0
      %p176 = por %p174, %p175
      %s178 = sadd.s32 %s177, 1
      %p181 = scmp.eq.s32.totalorder %s33, 1
      %p182 = scmp.ne.s32.totalorder %s177, %s179
      %p183 = scmp.eq.s32.totalorder %s33, 0
      %p184 = por %p182, %p183
      %p185 = scmp.ne.s32.totalorder %s177, %s179
      %p186 = scmp.eq.s32.totalorder %s38, 1
      %p187 = por %p185, %p186
      %p188 = scmp.ne.s32.totalorder %s179, %s180
      %p189 = scmp.eq.s32.totalorder %s38, 0
      %p190 = por %p188, %p189
      %p191 = scmp.ne.s32.totalorder %s179, %s180
      %p192 = scmp.eq.s32.totalorder %s39, 1
      %p193 = por %p191, %p192
      %p195 = scmp.ne.s32.totalorder %s180, %s194
      %p196 = scmp.eq.s32.totalorder %s39, 0
      %p197 = por %p195, %p196
      %s199 = sadd.s32 %s198, 1
      %p202 = scmp.eq.s32.totalorder %s33, 1
      %p203 = scmp.ne.s32.totalorder %s198, %s200
      %p204 = scmp.eq.s32.totalorder %s33, 0
      %p205 = por %p203, %p204
      %p206 = scmp.ne.s32.totalorder %s198, %s200
      %p207 = scmp.eq.s32.totalorder %s38, 1
      %p208 = por %p206, %p207
      %p209 = scmp.ne.s32.totalorder %s200, %s201
      %p210 = scmp.eq.s32.totalorder %s38, 0
      %p211 = por %p209, %p210
      %p212 = scmp.ne.s32.totalorder %s200, %s201
      %p213 = scmp.eq.s32.totalorder %s39, 1
      %p214 = por %p212, %p213
      %p216 = scmp.ne.s32.totalorder %s201, %s215
      %p217 = scmp.eq.s32.totalorder %s39, 0
      %p218 = por %p216, %p217
      %s220 = sadd.s32 %s219, 1
      %p223 = scmp.eq.s32.totalorder %s33, 1
      %p224 = scmp.ne.s32.totalorder %s219, %s221
      %p225 = scmp.eq.s32.totalorder %s33, 0
      %p226 = por %p224, %p225
      %p227 = scmp.ne.s32.totalorder %s219, %s221
      %p228 = scmp.eq.s32.totalorder %s38, 1
      %p229 = por %p227, %p228
      %p230 = scmp.ne.s32.totalorder %s221, %s222
      %p231 = scmp.eq.s32.totalorder %s38, 0
      %p232 = por %p230, %p231
      %p233 = scmp.ne.s32.totalorder %s221, %s222
      %p234 = scmp.eq.s32.totalorder %s39, 1
      %p235 = por %p233, %p234
      %p237 = scmp.ne.s32.totalorder %s222, %s236
      %p238 = scmp.eq.s32.totalorder %s39, 0
      %p239 = por %p237, %p238
      %s241 = sadd.s32 %s240, 1
      %p244 = scmp.eq.s32.totalorder %s33, 1
      %p245 = scmp.ne.s32.totalorder %s240, %s242
      %p246 = scmp.eq.s32.totalorder %s33, 0
      %p247 = por %p245, %p246
      %p248 = scmp.ne.s32.totalorder %s240, %s242
      %p249 = scmp.eq.s32.totalorder %s38, 1
      %p250 = por %p248, %p249
      %p251 = scmp.ne.s32.totalorder %s242, %s243
      %p252 = scmp.eq.s32.totalorder %s38, 0
      %p253 = por %p251, %p252
      %p254 = scmp.ne.s32.totalorder %s242, %s243
      %p255 = scmp.eq.s32.totalorder %s39, 1
      %p256 = por %p254, %p255
      %p258 = scmp.ne.s32.totalorder %s243, %s257
      %p259 = scmp.eq.s32.totalorder %s39, 0
      %p260 = por %p258, %p259
      %s262 = sadd.s32 %s261, 1
      %p265 = scmp.eq.s32.totalorder %s33, 1
      %p266 = scmp.ne.s32.totalorder %s261, %s263
      %p267 = scmp.eq.s32.totalorder %s33, 0
      %p268 = por %p266, %p267
      %p269 = scmp.ne.s32.totalorder %s261, %s263
      %p270 = scmp.eq.s32.totalorder %s38, 1
      %p271 = por %p269, %p270
      %p272 = scmp.ne.s32.totalorder %s263, %s264
      %p273 = scmp.eq.s32.totalorder %s38, 0
      %p274 = por %p272, %p273
      %p275 = scmp.ne.s32.totalorder %s263, %s264
      %p276 = scmp.eq.s32.totalorder %s39, 1
      %p277 = por %p275, %p276
      %p279 = scmp.ne.s32.totalorder %s264, %s278
      %p280 = scmp.eq.s32.totalorder %s39, 0
      %p281 = por %p279, %p280
      %s283 = sadd.s32 %s282, 1
      %p286 = scmp.eq.s32.totalorder %s33, 1
      %p287 = scmp.ne.s32.totalorder %s282, %s284
      %p288 = scmp.eq.s32.totalorder %s33, 0
      %p289 = por %p287, %p288
      %p290 = scmp.ne.s32.totalorder %s282, %s284
      %p291 = scmp.eq.s32.totalorder %s38, 1
      %p292 = por %p290, %p291
      %p293 = scmp.ne.s32.totalorder %s284, %s285
      %p294 = scmp.eq.s32.totalorder %s38, 0
      %p295 = por %p293, %p294
      %p296 = scmp.ne.s32.totalorder %s284, %s285
      %p297 = scmp.eq.s32.totalorder %s39, 1
      %p298 = por %p296, %p297
      %p300 = scmp.ne.s32.totalorder %s285, %s299
      %p301 = scmp.eq.s32.totalorder %s39, 0
      %p302 = por %p300, %p301
      %s304 = sadd.s32 %s303, 1
      %p307 = scmp.eq.s32.totalorder %s33, 1
      %p308 = scmp.ne.s32.totalorder %s303, %s305
      %p309 = scmp.eq.s32.totalorder %s33, 0
      %p310 = por %p308, %p309
      %p311 = scmp.ne.s32.totalorder %s303, %s305
      %p312 = scmp.eq.s32.totalorder %s38, 1
      %p313 = por %p311, %p312
      %p314 = scmp.ne.s32.totalorder %s305, %s306
      %p315 = scmp.eq.s32.totalorder %s38, 0
      %p316 = por %p314, %p315
      %p317 = scmp.ne.s32.totalorder %s305, %s306
      %p318 = scmp.eq.s32.totalorder %s39, 1
      %p319 = por %p317, %p318
      %p321 = scmp.ne.s32.totalorder %s306, %s320
      %p322 = scmp.eq.s32.totalorder %s39, 0
      %p323 = por %p321, %p322
      %s325 = sadd.s32 %s324, 1
      %p328 = scmp.eq.s32.totalorder %s33, 1
      %p329 = scmp.ne.s32.totalorder %s324, %s326
      %p330 = scmp.eq.s32.totalorder %s33, 0
      %p331 = por %p329, %p330
      %p332 = scmp.ne.s32.totalorder %s324, %s326
      %p333 = scmp.eq.s32.totalorder %s38, 1
      %p334 = por %p332, %p333
      %p335 = scmp.ne.s32.totalorder %s326, %s327
      %p336 = scmp.eq.s32.totalorder %s38, 0
      %p337 = por %p335, %p336
      %p338 = scmp.ne.s32.totalorder %s326, %s327
      %p339 = scmp.eq.s32.totalorder %s39, 1
      %p340 = por %p338, %p339
      %p342 = scmp.ne.s32.totalorder %s327, %s341
      %p343 = scmp.eq.s32.totalorder %s39, 0
      %p344 = por %p342, %p343
      %s346 = sadd.s32 %s345, 1
      %p349 = scmp.eq.s32.totalorder %s33, 1
      %p350 = scmp.ne.s32.totalorder %s345, %s347
      %p351 = scmp.eq.s32.totalorder %s33, 0
      %p352 = por %p350, %p351
      %p353 = scmp.ne.s32.totalorder %s345, %s347
      %p354 = scmp.eq.s32.totalorder %s38, 1
      %p355 = por %p353, %p354
      %p356 = scmp.ne.s32.totalorder %s347, %s348
      %p357 = scmp.eq.s32.totalorder %s38, 0
      %p358 = por %p356, %p357
      %p359 = scmp.ne.s32.totalorder %s347, %s348
      %p360 = scmp.eq.s32.totalorder %s39, 1
      %p361 = por %p359, %p360
      %p363 = scmp.ne.s32.totalorder %s348, %s362
      %p364 = scmp.eq.s32.totalorder %s39, 0
      %p365 = por %p363, %p364
      %s367 = sadd.s32 %s366, 1
      %p370 = scmp.eq.s32.totalorder %s33, 1
      %p371 = scmp.ne.s32.totalorder %s366, %s368
      %p372 = scmp.eq.s32.totalorder %s33, 0
      %p373 = por %p371, %p372
      %p374 = scmp.ne.s32.totalorder %s366, %s368
      %p375 = scmp.eq.s32.totalorder %s38, 1
      %p376 = por %p374, %p375
      %p377 = scmp.ne.s32.totalorder %s368, %s369
      %p378 = scmp.eq.s32.totalorder %s38, 0
      %p379 = por %p377, %p378
      %p380 = scmp.ne.s32.totalorder %s368, %s369
      %p381 = scmp.eq.s32.totalorder %s39, 1
      %p382 = por %p380, %p381
      %p384 = scmp.ne.s32.totalorder %s369, %s383
      %p385 = scmp.eq.s32.totalorder %s39, 0
      %p386 = por %p384, %p385
      %s388 = sadd.s32 %s387, 1
      %p391 = scmp.eq.s32.totalorder %s33, 1
      %p392 = scmp.ne.s32.totalorder %s387, %s389
      %p393 = scmp.eq.s32.totalorder %s33, 0
      %p394 = por %p392, %p393
      %p395 = scmp.ne.s32.totalorder %s387, %s389
      %p396 = scmp.eq.s32.totalorder %s38, 1
      %p397 = por %p395, %p396
      %p398 = scmp.ne.s32.totalorder %s389, %s390
      %p399 = scmp.eq.s32.totalorder %s38, 0
      %p400 = por %p398, %p399
      %p401 = scmp.ne.s32.totalorder %s389, %s390
      %p402 = scmp.eq.s32.totalorder %s39, 1
      %p403 = por %p401, %p402
      %p405 = scmp.ne.s32.totalorder %s390, %s404
      %p406 = scmp.eq.s32.totalorder %s39, 0
      %p407 = por %p405, %p406
      %s408 = ssub.s32 %s40, %s52
      %s409 = ssub.s32 %s41, %s48
      %s410 = sor.u32 %s408, %s409
      %p411 = scmp.eq.s32.totalorder %s410, 0
      %s413 = sadd.s32 %s412, 1
      %s414 = scalar_select %p411, %s412, %s413
      %p417 = pneg %p411
      %p418 = scmp.eq.s32.totalorder %s33, 1
      %p419 = por %p417, %p418
      %p420 = scmp.ne.s32.totalorder %s412, %s415
      %p421 = scmp.eq.s32.totalorder %s33, 0
      %p422 = por %p420, %p421
      %p423 = scmp.ne.s32.totalorder %s412, %s415
      %p424 = scmp.eq.s32.totalorder %s38, 1
      %p425 = por %p423, %p424
      %p426 = scmp.ne.s32.totalorder %s415, %s416
      %p427 = scmp.eq.s32.totalorder %s38, 0
      %p428 = por %p426, %p427
      %p429 = scmp.ne.s32.totalorder %s415, %s416
      %p430 = scmp.eq.s32.totalorder %s39, 1
      %p431 = por %p429, %p430
      %p433 = scmp.ne.s32.totalorder %s416, %s432
      %p434 = scmp.eq.s32.totalorder %s39, 0
      %p435 = por %p433, %p434
      %p436 = scmp.le.s32.totalorder 1, %s33
      %p437 = scmp.lt.s32.totalorder %s33, 3
      %p438 = pnand %p436, %p437
      %p439 = pneg %p438
      // Predicated region
      $region9: #{tpu_custom_call.1} parent=5 // pred_check
        _
      $region10: #{tpu_custom_call.1} parent=5 // pred_check_branch
        %441 = sbr.rel (%p438) target = $region12
      $region11: #{tpu_custom_call.1} parent=5 // pred_region
        %s442 = ssub.s32 %s33, 1
        // Predicated region
        $region13: #{tpu_custom_call.1} parent=11 // pred_check
          %p443 = pneg %p148
        $region14: #{tpu_custom_call.1} parent=11 // pred_check_branch
          %445 = sbr.rel (%p443) target = $region16
        $region15: #{tpu_custom_call.1} parent=11 // pred_region
          %s447 = ssub.s32 512, 512
          %448 = vsyncadd [#allocation10], %s447
          %s449 = sshll.u32 [#allocation9], 4
          %s450 = int_to_ptr.vmem [resolvable:$true] %s449
          %455 = dma.hbm_to_vmem [thread:$0]  %s3, 512, %s450, [#allocation10], 128, 128, 8
        $region16: #{tpu_custom_call.1} parent=11 // pred_fallthru
          _
        // Predicated region
        $region17: #{tpu_custom_call.1} parent=11 // pred_check
          %p456 = pneg %p169
        $region18: #{tpu_custom_call.1} parent=11 // pred_check_branch
          %458 = sbr.rel (%p456) target = $region20
        $region19: #{tpu_custom_call.1} parent=11 // pred_region
          %s460 = ssub.s32 512, 512
          %461 = vsyncadd [#allocation10], %s460
          %s462 = sshll.u32 [#allocation11], 4
          %s463 = int_to_ptr.vmem [resolvable:$true] %s462
          %468 = dma.hbm_to_vmem [thread:$0]  %s4, 512, %s463, [#allocation10], 128, 128, 8
        $region20: #{tpu_custom_call.1} parent=11 // pred_fallthru
          _
        // Predicated region
        $region21: #{tpu_custom_call.1} parent=11 // pred_check
          %p469 = pneg %p190
        $region22: #{tpu_custom_call.1} parent=11 // pred_check_branch
          %471 = sbr.rel (%p469) target = $region24
        $region23: #{tpu_custom_call.1} parent=11 // pred_region
          %s473 = ssub.s32 512, 512
          %474 = vsyncadd [#allocation13], %s473
          %s475 = sshll.u32 [#allocation12], 4
          %s476 = int_to_ptr.vmem [resolvable:$true] %s475
          %481 = dma.hbm_to_vmem [thread:$0]  %s5, 512, %s476, [#allocation13], 128, 128, 8
        $region24: #{tpu_custom_call.1} parent=11 // pred_fallthru
          _
        // Predicated region
        $region25: #{tpu_custom_call.1} parent=11 // pred_check
          %p482 = pneg %p211
        $region26: #{tpu_custom_call.1} parent=11 // pred_check_branch
          %484 = sbr.rel (%p482) target = $region28
        $region27: #{tpu_custom_call.1} parent=11 // pred_region
          _
        $region28: #{tpu_custom_call.1} parent=11 // pred_fallthru
          _
        // Predicated region
        $region29: #{tpu_custom_call.1} parent=11 // pred_check
          %p485 = pneg %p232
        $region30: #{tpu_custom_call.1} parent=11 // pred_check_branch
          %487 = sbr.rel (%p485) target = $region32
        $region31: #{tpu_custom_call.1} parent=11 // pred_region
          _
        $region32: #{tpu_custom_call.1} parent=11 // pred_fallthru
          _
        // Predicated region
        $region33: #{tpu_custom_call.1} parent=11 // pred_check
          %p488 = pneg %p253
        $region34: #{tpu_custom_call.1} parent=11 // pred_check_branch
          %490 = sbr.rel (%p488) target = $region36
        $region35: #{tpu_custom_call.1} parent=11 // pred_region
          _
        $region36: #{tpu_custom_call.1} parent=11 // pred_fallthru
          _
        // Predicated region
        $region37: #{tpu_custom_call.1} parent=11 // pred_check
          %p491 = pneg %p274
        $region38: #{tpu_custom_call.1} parent=11 // pred_check_branch
          %493 = sbr.rel (%p491) target = $region40
        $region39: #{tpu_custom_call.1} parent=11 // pred_region
          _
        $region40: #{tpu_custom_call.1} parent=11 // pred_fallthru
          _
        // Predicated region
        $region41: #{tpu_custom_call.1} parent=11 // pred_check
          %p494 = pneg %p295
        $region42: #{tpu_custom_call.1} parent=11 // pred_check_branch
          %496 = sbr.rel (%p494) target = $region44
        $region43: #{tpu_custom_call.1} parent=11 // pred_region
          _
        $region44: #{tpu_custom_call.1} parent=11 // pred_fallthru
          _
        // Predicated region
        $region45: #{tpu_custom_call.1} parent=11 // pred_check
          %p497 = pneg %p316
        $region46: #{tpu_custom_call.1} parent=11 // pred_check_branch
          %499 = sbr.rel (%p497) target = $region48
        $region47: #{tpu_custom_call.1} parent=11 // pred_region
          _
        $region48: #{tpu_custom_call.1} parent=11 // pred_fallthru
          _
        // Predicated region
        $region49: #{tpu_custom_call.1} parent=11 // pred_check
          %p500 = pneg %p337
        $region50: #{tpu_custom_call.1} parent=11 // pred_check_branch
          %502 = sbr.rel (%p500) target = $region52
        $region51: #{tpu_custom_call.1} parent=11 // pred_region
          _
        $region52: #{tpu_custom_call.1} parent=11 // pred_fallthru
          _
        // Predicated region
        $region53: #{tpu_custom_call.1} parent=11 // pred_check
          %p503 = pneg %p358
        $region54: #{tpu_custom_call.1} parent=11 // pred_check_branch
          %505 = sbr.rel (%p503) target = $region56
        $region55: #{tpu_custom_call.1} parent=11 // pred_region
          %s507 = ssub.s32 512, 512
          %508 = vsyncadd [#allocation13], %s507
          %s509 = sshll.u32 [#allocation14], 4
          %s510 = int_to_ptr.vmem [resolvable:$true] %s509
          %515 = dma.hbm_to_vmem [thread:$0]  %s13, 512, %s510, [#allocation13], 128, 128, 8
        $region56: #{tpu_custom_call.1} parent=11 // pred_fallthru
          _
        // Predicated region
        $region57: #{tpu_custom_call.1} parent=11 // pred_check
          %p516 = pneg %p379
        $region58: #{tpu_custom_call.1} parent=11 // pred_check_branch
          %518 = sbr.rel (%p516) target = $region60
        $region59: #{tpu_custom_call.1} parent=11 // pred_region
          _
        $region60: #{tpu_custom_call.1} parent=11 // pred_fallthru
          _
        // Predicated region
        $region61: #{tpu_custom_call.1} parent=11 // pred_check
          %p519 = pneg %p400
        $region62: #{tpu_custom_call.1} parent=11 // pred_check_branch
          %521 = sbr.rel (%p519) target = $region64
        $region63: #{tpu_custom_call.1} parent=11 // pred_region
          _
        $region64: #{tpu_custom_call.1} parent=11 // pred_fallthru
          _
      $region12: #{tpu_custom_call.1} parent=5 // pred_fallthru
        _
      %p522 = scmp.lt.s32.totalorder %s33, 2
      // Predicated region
      $region65: #{tpu_custom_call.1} parent=5 // pred_check
        %p523 = pneg %p522
      $region66: #{tpu_custom_call.1} parent=5 // pred_check_branch
        %525 = sbr.rel (%p523) target = $region68
      $region67: #{tpu_custom_call.1} parent=5 // pred_region
        // Predicated region
        $region69: #{tpu_custom_call.1} parent=67 // pred_check
          %p526 = pneg %p67
        $region70: #{tpu_custom_call.1} parent=67 // pred_check_branch
          %528 = sbr.rel (%p526) target = $region72
        $region71: #{tpu_custom_call.1} parent=67 // pred_region
          %s529 = sand.u32 %s57, 1
          %s530 = scalar_lea.sflag [#allocation4], %s529
          %s531 = sand.u32 %s57, 1
          %s532 = smul.addr %s531, 8
          %s533 = scalar_lea.vmem [#allocation3], %s532
          %s535 = ssub.s32 128, 128
          %536 = vsyncadd %s530, %s535
          %s537 = sadd.s32 %s41, %s40
          %s538 = smul.addr %s537, 128
          %s539 = scalar_lea.hbm %s0, %s538
          %s541 = sshll.u32 %s533, 4
          %s542 = int_to_ptr.vmem [resolvable:$true] %s541
          %544 = dma.hbm_to_vmem [thread:$0]  %s539, 128, %s542, %s530
        $region72: #{tpu_custom_call.1} parent=67 // pred_fallthru
          _
        // Predicated region
        $region73: #{tpu_custom_call.1} parent=67 // pred_check
          %p545 = pneg %p93
        $region74: #{tpu_custom_call.1} parent=67 // pred_check_branch
          %547 = sbr.rel (%p545) target = $region76
        $region75: #{tpu_custom_call.1} parent=67 // pred_region
          %s548 = sand.u32 %s33, 1
          %s549 = scalar_lea.sflag [#allocation7], %s548
          %s550 = sand.u32 %s83, 1
          %s551 = smul.addr %s550, 8
          %s552 = scalar_lea.vmem [#allocation6], %s551
          %s554 = ssub.s32 128, 128
          %555 = vsyncadd %s549, %s554
          %s556 = smul.addr %s40, 128
          %s557 = scalar_lea.hbm %s1, %s556
          %s559 = sshll.u32 %s552, 4
          %s560 = int_to_ptr.vmem [resolvable:$true] %s559
          %562 = dma.hbm_to_vmem [thread:$0]  %s557, 128, %s560, %s549
        $region76: #{tpu_custom_call.1} parent=67 // pred_fallthru
          _
        // Predicated region
        $region77: #{tpu_custom_call.1} parent=67 // pred_check
          %p563 = pneg %p121
        $region78: #{tpu_custom_call.1} parent=67 // pred_check_branch
          %565 = sbr.rel (%p563) target = $region80
        $region79: #{tpu_custom_call.1} parent=67 // pred_region
          %s566 = sand.u32 %s33, 1
          %s567 = scalar_lea.sflag [#allocation7], %s566
          %s568 = sand.u32 %s111, 1
          %s569 = smul.addr %s568, 8
          %s570 = scalar_lea.vmem [#allocation8], %s569
          %s572 = ssub.s32 128, 128
          %573 = vsyncadd %s567, %s572
          %s574 = sadd.s32 %s41, %s40
          %s575 = smul.addr %s574, 128
          %s576 = scalar_lea.hbm %s2, %s575
          %s578 = sshll.u32 %s570, 4
          %s579 = int_to_ptr.vmem [resolvable:$true] %s578
          %581 = dma.hbm_to_vmem [thread:$0]  %s576, 128, %s579, %s567
        $region80: #{tpu_custom_call.1} parent=67 // pred_fallthru
          _
      $region68: #{tpu_custom_call.1} parent=5 // pred_fallthru
        _
      %p582 = scmp.le.s32.totalorder 1, %s33
      %p583 = scmp.lt.s32.totalorder %s33, 3
      %p584 = pnand %p582, %p583
      %p585 = pneg %p584
      // Predicated region
      $region81: #{tpu_custom_call.1} parent=5 // pred_check
        _
      $region82: #{tpu_custom_call.1} parent=5 // pred_check_branch
        %587 = sbr.rel (%p584) target = $region84
      $region83: #{tpu_custom_call.1} parent=5 // pred_region
        %s588 = ssub.s32 %s33, 1
        %s589 = sand.u32 %s60, 1
        %s590 = scalar_lea.sflag [#allocation4], %s589
        %s591 = sand.u32 %s60, 1
        %s592 = smul.addr %s591, 8
        %s593 = scalar_lea.vmem [#allocation3], %s592
        // Predicated region
        $region85: #{tpu_custom_call.1} parent=83 // pred_check
          %p594 = pneg %p73
        $region86: #{tpu_custom_call.1} parent=83 // pred_check_branch
          %596 = sbr.rel (%p594) target = $region88
        $region87: #{tpu_custom_call.1} parent=83 // pred_region
          %597 = dma.done %s590, 128
        $region88: #{tpu_custom_call.1} parent=83 // pred_fallthru
          _
        %s598 = sand.u32 %s38, 1
        %s599 = scalar_lea.sflag [#allocation7], %s598
        %s600 = sand.u32 %s86, 1
        %s601 = smul.addr %s600, 8
        %s602 = scalar_lea.vmem [#allocation6], %s601
        // Predicated region
        $region89: #{tpu_custom_call.1} parent=83 // pred_check
          %p603 = pneg %p99
        $region90: #{tpu_custom_call.1} parent=83 // pred_check_branch
          %605 = sbr.rel (%p603) target = $region92
        $region91: #{tpu_custom_call.1} parent=83 // pred_region
          %606 = dma.done %s599, 128
        $region92: #{tpu_custom_call.1} parent=83 // pred_fallthru
          _
        %s607 = sand.u32 %s38, 1
        %s608 = scalar_lea.sflag [#allocation7], %s607
        %s609 = sand.u32 %s114, 1
        %s610 = smul.addr %s609, 8
        %s611 = scalar_lea.vmem [#allocation8], %s610
        // Predicated region
        $region93: #{tpu_custom_call.1} parent=83 // pred_check
          %p612 = pneg %p127
        $region94: #{tpu_custom_call.1} parent=83 // pred_check_branch
          %614 = sbr.rel (%p612) target = $region96
        $region95: #{tpu_custom_call.1} parent=83 // pred_region
          %615 = dma.done %s608, 128
        $region96: #{tpu_custom_call.1} parent=83 // pred_fallthru
          _
        // Predicated region
        $region97: #{tpu_custom_call.1} parent=83 // pred_check
          %p616 = pneg %p148
        $region98: #{tpu_custom_call.1} parent=83 // pred_check_branch
          %618 = sbr.rel (%p616) target = $region100
        $region99: #{tpu_custom_call.1} parent=83 // pred_region
          %619 = dma.done [#allocation10], 512
        $region100: #{tpu_custom_call.1} parent=83 // pred_fallthru
          _
        // Predicated region
        $region101: #{tpu_custom_call.1} parent=83 // pred_check
          %p620 = pneg %p169
        $region102: #{tpu_custom_call.1} parent=83 // pred_check_branch
          %622 = sbr.rel (%p620) target = $region104
        $region103: #{tpu_custom_call.1} parent=83 // pred_region
          %623 = dma.done [#allocation10], 512
        $region104: #{tpu_custom_call.1} parent=83 // pred_fallthru
          _
        // Predicated region
        $region105: #{tpu_custom_call.1} parent=83 // pred_check
          %p624 = pneg %p190
        $region106: #{tpu_custom_call.1} parent=83 // pred_check_branch
          %626 = sbr.rel (%p624) target = $region108
        $region107: #{tpu_custom_call.1} parent=83 // pred_region
          %627 = dma.done [#allocation13], 512
        $region108: #{tpu_custom_call.1} parent=83 // pred_fallthru
          _
        // Predicated region
        $region109: #{tpu_custom_call.1} parent=83 // pred_check
          %p628 = pneg %p358
        $region110: #{tpu_custom_call.1} parent=83 // pred_check_branch
          %630 = sbr.rel (%p628) target = $region112
        $region111: #{tpu_custom_call.1} parent=83 // pred_region
          %631 = dma.done [#allocation13], 512
        $region112: #{tpu_custom_call.1} parent=83 // pred_fallthru
          _
        %s632 = sand.u32 %s60, 1
        %s633 = scalar_lea.sflag [#allocation4], %s632
        %s634 = sand.u32 %s60, 1
        %s635 = smul.addr %s634, 8
        %s636 = scalar_lea.vmem [#allocation3], %s635
        %p637 = pneg %p73
        %p638 = pneg %p70
        %s639 = sand.u32 %s38, 1
        %s640 = scalar_lea.sflag [#allocation7], %s639
        %s641 = sand.u32 %s86, 1
        %s642 = smul.addr %s641, 8
        %s643 = scalar_lea.vmem [#allocation6], %s642
        %p644 = pneg %p99
        %p645 = pneg %p96
        %s646 = sand.u32 %s38, 1
        %s647 = scalar_lea.sflag [#allocation7], %s646
        %s648 = sand.u32 %s114, 1
        %s649 = smul.addr %s648, 8
        %s650 = scalar_lea.vmem [#allocation8], %s649
        %p651 = pneg %p127
        %p652 = pneg %p124
        %p653 = pneg %p148
        %p654 = pneg %p145
        %p655 = pneg %p169
        %p656 = pneg %p166
        %p657 = pneg %p190
        %p658 = pneg %p187
        %p659 = pneg %p211
        %p660 = pneg %p208
        %p661 = pneg %p232
        %p662 = pneg %p229
        %p663 = pneg %p253
        %p664 = pneg %p250
        %p665 = pneg %p274
        %p666 = pneg %p271
        %p667 = pneg %p295
        %p668 = pneg %p292
        %p669 = pneg %p316
        %p670 = pneg %p313
        %p671 = pneg %p337
        %p672 = pneg %p334
        %p673 = pneg %p358
        %p674 = pneg %p355
        %p675 = pneg %p379
        %p676 = pneg %p376
        %p677 = pneg %p400
        %p678 = pneg %p397
        %p679 = pneg %p428
        %p680 = pneg %p425
        %s681 = sand.u32 %s415, 1
        %s682 = scalar_lea.sflag [#allocation5], %s681
        %s683 = sand.u32 %s415, 1
        %s684 = smul.addr %s683, 8
        %s685 = scalar_lea.vmem [#allocation15], %s684
        %v686 = vld [vmem:[%s593] sm:$0xff]
        %v687 = vld [vmem:[%s602] sm:$0xff]
        %v688 = vld [vmem:[#allocation9] sm:$0xff]
        %v689 = vld [vmem:[#allocation9 + $0x8] sm:$0xff]
        %v690 = vld [vmem:[#allocation9 + $0x10] sm:$0xff]
        %v691 = vld [vmem:[#allocation9 + $0x18] sm:$0xff]
        %vm692 = vcmask 261120
        %v694 = vsel %vm692, %v686, 0
        %696 = vmatprep.subr.mxu0 0.0
        %697 = vmatpush1.msra.mxu0 %v688
        %698 = vmatprep.subr.mxu0 0.0
        %699 = vmatpush1.msra.mxu0 %v689
        %700 = vmatprep.subr.mxu0 0.0
        %701 = vmatpush1.msra.mxu0 %v690
        %702 = vmatprep.subr.mxu0 0.0
        %703 = vmatpush1.msra.mxu0 %v691
        %704 = vmatprep.subr.mxu0 0.0
        %705 = vmatpush1.msra.mxu0 0.0
        %706 = vmatprep.subr.mxu0 0.0
        %707 = vmatpush1.msra.mxu0 0.0
        %708 = vmatprep.subr.mxu0 0.0
        %709 = vmatpush1.msra.mxu0 0.0
        %710 = vmatprep.subr.mxu0 0.0
        %711 = vmatpush1.msra.mxu0 0.0
        %712 = vmatprep.subr.mxu0 0.0
        %713 = vmatpush1.msra.mxu0 0.0
        %714 = vmatprep.subr.mxu0 0.0
        %715 = vmatpush1.msra.mxu0 0.0
        %716 = vmatprep.subr.mxu0 0.0
        %717 = vmatpush1.msra.mxu0 0.0
        %718 = vmatprep.subr.mxu0 0.0
        %719 = vmatpush1.msra.mxu0 0.0
        %720 = vmatprep.subr.mxu0 0.0
        %721 = vmatpush1.msra.mxu0 0.0
        %722 = vmatprep.subr.mxu0 0.0
        %723 = vmatpush1.msra.mxu0 0.0
        %724 = vmatprep.subr.mxu0 0.0
        %725 = vmatpush1.msra.mxu0 0.0
        %726 = vmatprep.subr.mxu0 0.0
        %727 = vmatpush1.msra.mxu0 0.0
        %728 = vmatprep.subr.mxu0 0.0
        %729 = vmatpush1.msra.mxu0 0.0
        %730 = vmatprep.subr.mxu0 0.0
        %731 = vmatpush1.msra.mxu0 0.0
        %732 = vmatprep.subr.mxu0 0.0
        %733 = vmatpush1.msra.mxu0 0.0
        %734 = vmatprep.subr.mxu0 0.0
        %735 = vmatpush1.msra.mxu0 0.0
        %736 = vmatprep.subr.mxu0 0.0
        %737 = vmatpush1.msra.mxu0 0.0
        %738 = vmatprep.subr.mxu0 0.0
        %739 = vmatpush1.msra.mxu0 0.0
        %740 = vmatprep.subr.mxu0 0.0
        %741 = vmatpush1.msra.mxu0 0.0
        %742 = vmatprep.subr.mxu0 0.0
        %743 = vmatpush1.msra.mxu0 0.0
        %744 = vmatprep.subr.mxu0 0.0
        %745 = vmatpush1.msra.mxu0 0.0
        %746 = vmatprep.subr.mxu0 0.0
        %747 = vmatpush1.msra.mxu0 0.0
        %748 = vmatprep.subr.mxu0 0.0
        %749 = vmatpush1.msra.mxu0 0.0
        %750 = vmatprep.subr.mxu0 0.0
        %751 = vmatpush1.msra.mxu0 0.0
        %752 = vmatprep.subr.mxu0 0.0
        %753 = vmatpush1.msra.mxu0 0.0
        %754 = vmatprep.subr.mxu0 0.0
        %755 = vmatpush1.msra.mxu0 0.0
        %756 = vmatprep.subr.mxu0 0.0
        %757 = vmatpush1.msra.mxu0 0.0
        %758 = vmatprep.subr.mxu0 0.0
        %759 = vmatpush1.msra.mxu0 0.0
        %760 = vmatprep.mubr.f32.mxu0 0.0
        %761 = vmatmul.mubr.f32.gmra.mrb[0].mxu0 %v694
        %v762 = vpop.f32.mrb[0].mxu0
        %v763 = vadd.f32 0.0, %v762
        %v764 = vpop.f32.mrb[0].mxu0
        %765 = vdwg.mxu0
        %v766 = vld [vmem:[#allocation11] sm:$0xff]
        %v767 = vld [vmem:[#allocation11 + $0x8] sm:$0xff]
        %v768 = vld [vmem:[#allocation11 + $0x10] sm:$0xff]
        %v769 = vld [vmem:[#allocation11 + $0x18] sm:$0xff]
        %v771 = vsel %vm692, %v687, 0
        %773 = vmatprep.subr.mxu0 0.0
        %774 = vmatpush1.msra.mxu0 %v766
        %775 = vmatprep.subr.mxu0 0.0
        %776 = vmatpush1.msra.mxu0 %v767
        %777 = vmatprep.subr.mxu0 0.0
        %778 = vmatpush1.msra.mxu0 %v768
        %779 = vmatprep.subr.mxu0 0.0
        %780 = vmatpush1.msra.mxu0 %v769
        %781 = vmatprep.subr.mxu0 0.0
        %782 = vmatpush1.msra.mxu0 0.0
        %783 = vmatprep.subr.mxu0 0.0
        %784 = vmatpush1.msra.mxu0 0.0
        %785 = vmatprep.subr.mxu0 0.0
        %786 = vmatpush1.msra.mxu0 0.0
        %787 = vmatprep.subr.mxu0 0.0
        %788 = vmatpush1.msra.mxu0 0.0
        %789 = vmatprep.subr.mxu0 0.0
        %790 = vmatpush1.msra.mxu0 0.0
        %791 = vmatprep.subr.mxu0 0.0
        %792 = vmatpush1.msra.mxu0 0.0
        %793 = vmatprep.subr.mxu0 0.0
        %794 = vmatpush1.msra.mxu0 0.0
        %795 = vmatprep.subr.mxu0 0.0
        %796 = vmatpush1.msra.mxu0 0.0
        %797 = vmatprep.subr.mxu0 0.0
        %798 = vmatpush1.msra.mxu0 0.0
        %799 = vmatprep.subr.mxu0 0.0
        %800 = vmatpush1.msra.mxu0 0.0
        %801 = vmatprep.subr.mxu0 0.0
        %802 = vmatpush1.msra.mxu0 0.0
        %803 = vmatprep.subr.mxu0 0.0
        %804 = vmatpush1.msra.mxu0 0.0
        %805 = vmatprep.subr.mxu0 0.0
        %806 = vmatpush1.msra.mxu0 0.0
        %807 = vmatprep.subr.mxu0 0.0
        %808 = vmatpush1.msra.mxu0 0.0
        %809 = vmatprep.subr.mxu0 0.0
        %810 = vmatpush1.msra.mxu0 0.0
        %811 = vmatprep.subr.mxu0 0.0
        %812 = vmatpush1.msra.mxu0 0.0
        %813 = vmatprep.subr.mxu0 0.0
        %814 = vmatpush1.msra.mxu0 0.0
        %815 = vmatprep.subr.mxu0 0.0
        %816 = vmatpush1.msra.mxu0 0.0
        %817 = vmatprep.subr.mxu0 0.0
        %818 = vmatpush1.msra.mxu0 0.0
        %819 = vmatprep.subr.mxu0 0.0
        %820 = vmatpush1.msra.mxu0 0.0
        %821 = vmatprep.subr.mxu0 0.0
        %822 = vmatpush1.msra.mxu0 0.0
        %823 = vmatprep.subr.mxu0 0.0
        %824 = vmatpush1.msra.mxu0 0.0
        %825 = vmatprep.subr.mxu0 0.0
        %826 = vmatpush1.msra.mxu0 0.0
        %827 = vmatprep.subr.mxu0 0.0
        %828 = vmatpush1.msra.mxu0 0.0
        %829 = vmatprep.subr.mxu0 0.0
        %830 = vmatpush1.msra.mxu0 0.0
        %831 = vmatprep.subr.mxu0 0.0
        %832 = vmatpush1.msra.mxu0 0.0
        %833 = vmatprep.subr.mxu0 0.0
        %834 = vmatpush1.msra.mxu0 0.0
        %835 = vmatprep.subr.mxu0 0.0
        %836 = vmatpush1.msra.mxu0 0.0
        %837 = vmatprep.mubr.f32.mxu0 0.0
        %838 = vmatmul.mubr.f32.gmra.mrb[0].mxu0 %v771
        %v839 = vpop.f32.mrb[0].mxu0
        %v840 = vadd.f32 0.0, %v839
        %v841 = vpop.f32.mrb[0].mxu0
        %842 = vdwg.mxu0
        %v843 = vld [vmem:[%s611] sm:$0xff]
        %vm844 = vcmask 64512
        %v846 = vsel %vm844, %v763, 0
        %v849 = vsel %vm844, %v840, 0
        %851 = vmatprep.subr.mxu0 0.0
        %852 = vmatpush1.xpose.msra.mxu0 %v849
        %853 = vmatprep.subr.mxu0 0.0
        %854 = vmatpush1.xpose.msra.mxu0 0.0
        %855 = vmatprep.subr.mxu0 0.0
        %856 = vmatpush1.xpose.msra.mxu0 0.0
        %857 = vmatprep.subr.mxu0 0.0
        %858 = vmatpush1.xpose.msra.mxu0 0.0
        %859 = vmatprep.subr.mxu0 0.0
        %860 = vmatpush1.xpose.msra.mxu0 0.0
        %861 = vmatprep.subr.mxu0 0.0
        %862 = vmatpush1.xpose.msra.mxu0 0.0
        %863 = vmatprep.subr.mxu0 0.0
        %864 = vmatpush1.xpose.msra.mxu0 0.0
        %865 = vmatprep.subr.mxu0 0.0
        %866 = vmatpush1.xpose.msra.mxu0 0.0
        %867 = vmatprep.subr.mxu0 0.0
        %868 = vmatpush1.xpose.msra.mxu0 0.0
        %869 = vmatprep.subr.mxu0 0.0
        %870 = vmatpush1.xpose.msra.mxu0 0.0
        %871 = vmatprep.subr.mxu0 0.0
        %872 = vmatpush1.xpose.msra.mxu0 0.0
        %873 = vmatprep.subr.mxu0 0.0
        %874 = vmatpush1.xpose.msra.mxu0 0.0
        %875 = vmatprep.subr.mxu0 0.0
        %876 = vmatpush1.xpose.msra.mxu0 0.0
        %877 = vmatprep.subr.mxu0 0.0
        %878 = vmatpush1.xpose.msra.mxu0 0.0
        %879 = vmatprep.subr.mxu0 0.0
        %880 = vmatpush1.xpose.msra.mxu0 0.0
        %881 = vmatprep.subr.mxu0 0.0
        %882 = vmatpush1.xpose.msra.mxu0 0.0
        %883 = vmatprep.subr.mxu0 0.0
        %884 = vmatpush1.xpose.msra.mxu0 0.0
        %885 = vmatprep.subr.mxu0 0.0
        %886 = vmatpush1.xpose.msra.mxu0 0.0
        %887 = vmatprep.subr.mxu0 0.0
        %888 = vmatpush1.xpose.msra.mxu0 0.0
        %889 = vmatprep.subr.mxu0 0.0
        %890 = vmatpush1.xpose.msra.mxu0 0.0
        %891 = vmatprep.subr.mxu0 0.0
        %892 = vmatpush1.xpose.msra.mxu0 0.0
        %893 = vmatprep.subr.mxu0 0.0
        %894 = vmatpush1.xpose.msra.mxu0 0.0
        %895 = vmatprep.subr.mxu0 0.0
        %896 = vmatpush1.xpose.msra.mxu0 0.0
        %897 = vmatprep.subr.mxu0 0.0
        %898 = vmatpush1.xpose.msra.mxu0 0.0
        %899 = vmatprep.subr.mxu0 0.0
        %900 = vmatpush1.xpose.msra.mxu0 0.0
        %901 = vmatprep.subr.mxu0 0.0
        %902 = vmatpush1.xpose.msra.mxu0 0.0
        %903 = vmatprep.subr.mxu0 0.0
        %904 = vmatpush1.xpose.msra.mxu0 0.0
        %905 = vmatprep.subr.mxu0 0.0
        %906 = vmatpush1.xpose.msra.mxu0 0.0
        %907 = vmatprep.subr.mxu0 0.0
        %908 = vmatpush1.xpose.msra.mxu0 0.0
        %909 = vmatprep.subr.mxu0 0.0
        %910 = vmatpush1.xpose.msra.mxu0 0.0
        %911 = vmatprep.subr.mxu0 0.0
        %912 = vmatpush1.xpose.msra.mxu0 0.0
        %913 = vmatprep.subr.mxu0 0.0
        %914 = vmatpush1.xpose.msra.mxu0 0.0
        %915 = vmatprep.mubr.f32.mxu0 0.0
        %916 = vmatmul.mubr.f32.gmra.mrb[0].mxu0 %v846
        %v917 = vpop.f32.mrb[0].mxu0
        %v918 = vadd.f32 0.0, %v917
        %v919 = vpop.f32.mrb[0].mxu0
        %920 = vdwg.mxu0
        %v921 = vsub.f32 %v918, %v843
        %v922 = vsel %vm844, %v921, -inf
        %923 = vmax.xlane.f32.xlu0 %v922
        %v924 = vpop.xlane.xlu0 %923
        %v925 = vsub.f32 %v921, %v924
        %v926 = vmul.f32 %v925, 1.442695
        %v927 = vpow.pop %v926
        %v928 = vsel %vm844, %v927, 0.0
        %929 = vadd.xlane.f32.xlu0 %v928
        %v930 = vpop.xlane.xlu0 %929
        %v931 = vrcp.pop %v930
        %v932 = vmul.f32 %v927, %v931
        %933 = vrot.lane.b32.xlu0 %v840, 96
        %v934 = vpop.permute.xlu0 %933
        %v937 = vsel %vm844, %v932, 0
        %939 = vmatprep.subr.mxu0 0.0
        %940 = vmatpush1.msra.mxu0 %v934
        %941 = vmatprep.subr.mxu0 0.0
        %942 = vmatpush1.msra.mxu0 0.0
        %943 = vmatprep.subr.mxu0 0.0
        %944 = vmatpush1.msra.mxu0 0.0
        %945 = vmatprep.subr.mxu0 0.0
        %946 = vmatpush1.msra.mxu0 0.0
        %947 = vmatprep.subr.mxu0 0.0
        %948 = vmatpush1.msra.mxu0 0.0
        %949 = vmatprep.subr.mxu0 0.0
        %950 = vmatpush1.msra.mxu0 0.0
        %951 = vmatprep.subr.mxu0 0.0
        %952 = vmatpush1.msra.mxu0 0.0
        %953 = vmatprep.subr.mxu0 0.0
        %954 = vmatpush1.msra.mxu0 0.0
        %955 = vmatprep.subr.mxu0 0.0
        %956 = vmatpush1.msra.mxu0 0.0
        %957 = vmatprep.subr.mxu0 0.0
        %958 = vmatpush1.msra.mxu0 0.0
        %959 = vmatprep.subr.mxu0 0.0
        %960 = vmatpush1.msra.mxu0 0.0
        %961 = vmatprep.subr.mxu0 0.0
        %962 = vmatpush1.msra.mxu0 0.0
        %963 = vmatprep.subr.mxu0 0.0
        %964 = vmatpush1.msra.mxu0 0.0
        %965 = vmatprep.subr.mxu0 0.0
        %966 = vmatpush1.msra.mxu0 0.0
        %967 = vmatprep.subr.mxu0 0.0
        %968 = vmatpush1.msra.mxu0 0.0
        %969 = vmatprep.subr.mxu0 0.0
        %970 = vmatpush1.msra.mxu0 0.0
        %971 = vmatprep.subr.mxu0 0.0
        %972 = vmatpush1.msra.mxu0 0.0
        %973 = vmatprep.subr.mxu0 0.0
        %974 = vmatpush1.msra.mxu0 0.0
        %975 = vmatprep.subr.mxu0 0.0
        %976 = vmatpush1.msra.mxu0 0.0
        %977 = vmatprep.subr.mxu0 0.0
        %978 = vmatpush1.msra.mxu0 0.0
        %979 = vmatprep.subr.mxu0 0.0
        %980 = vmatpush1.msra.mxu0 0.0
        %981 = vmatprep.subr.mxu0 0.0
        %982 = vmatpush1.msra.mxu0 0.0
        %983 = vmatprep.subr.mxu0 0.0
        %984 = vmatpush1.msra.mxu0 0.0
        %985 = vmatprep.subr.mxu0 0.0
        %986 = vmatpush1.msra.mxu0 0.0
        %987 = vmatprep.subr.mxu0 0.0
        %988 = vmatpush1.msra.mxu0 0.0
        %989 = vmatprep.subr.mxu0 0.0
        %990 = vmatpush1.msra.mxu0 0.0
        %991 = vmatprep.subr.mxu0 0.0
        %992 = vmatpush1.msra.mxu0 0.0
        %993 = vmatprep.subr.mxu0 0.0
        %994 = vmatpush1.msra.mxu0 0.0
        %995 = vmatprep.subr.mxu0 0.0
        %996 = vmatpush1.msra.mxu0 0.0
        %997 = vmatprep.subr.mxu0 0.0
        %998 = vmatpush1.msra.mxu0 0.0
        %999 = vmatprep.subr.mxu0 0.0
        %1000 = vmatpush1.msra.mxu0 0.0
        %1001 = vmatprep.subr.mxu0 0.0
        %1002 = vmatpush1.msra.mxu0 0.0
        %1003 = vmatprep.mubr.f32.mxu0 0.0
        %1004 = vmatmul.mubr.f32.gmra.mrb[0].mxu0 %v937
        %v1005 = vpop.f32.mrb[0].mxu0
        %v1006 = vadd.f32 0.0, %v1005
        %v1007 = vpop.f32.mrb[0].mxu0
        %1008 = vdwg.mxu0
        %1009 = vst.msk [vmem:[#allocation2] sm:$0xff] %vm844, %v1006
        %1010 = vrot.lane.b32.xlu0 %v763, 120
        %v1011 = vpop.permute.xlu0 %1010
        %1012 = vrot.lane.b32.xlu0 %v840, 120
        %v1013 = vpop.permute.xlu0 %1012
        %v1014 = vsel %vm844, %v1011, 0
        %v1016 = vsel %vm844, %v1013, 0
        %1018 = vmatprep.subr.mxu0 0.0
        %1019 = vmatpush1.xpose.msra.mxu0 %v1016
        %1020 = vmatprep.subr.mxu0 0.0
        %1021 = vmatpush1.xpose.msra.mxu0 0.0
        %1022 = vmatprep.subr.mxu0 0.0
        %1023 = vmatpush1.xpose.msra.mxu0 0.0
        %1024 = vmatprep.subr.mxu0 0.0
        %1025 = vmatpush1.xpose.msra.mxu0 0.0
        %1026 = vmatprep.subr.mxu0 0.0
        %1027 = vmatpush1.xpose.msra.mxu0 0.0
        %1028 = vmatprep.subr.mxu0 0.0
        %1029 = vmatpush1.xpose.msra.mxu0 0.0
        %1030 = vmatprep.subr.mxu0 0.0
        %1031 = vmatpush1.xpose.msra.mxu0 0.0
        %1032 = vmatprep.subr.mxu0 0.0
        %1033 = vmatpush1.xpose.msra.mxu0 0.0
        %1034 = vmatprep.subr.mxu0 0.0
        %1035 = vmatpush1.xpose.msra.mxu0 0.0
        %1036 = vmatprep.subr.mxu0 0.0
        %1037 = vmatpush1.xpose.msra.mxu0 0.0
        %1038 = vmatprep.subr.mxu0 0.0
        %1039 = vmatpush1.xpose.msra.mxu0 0.0
        %1040 = vmatprep.subr.mxu0 0.0
        %1041 = vmatpush1.xpose.msra.mxu0 0.0
        %1042 = vmatprep.subr.mxu0 0.0
        %1043 = vmatpush1.xpose.msra.mxu0 0.0
        %1044 = vmatprep.subr.mxu0 0.0
        %1045 = vmatpush1.xpose.msra.mxu0 0.0
        %1046 = vmatprep.subr.mxu0 0.0
        %1047 = vmatpush1.xpose.msra.mxu0 0.0
        %1048 = vmatprep.subr.mxu0 0.0
        %1049 = vmatpush1.xpose.msra.mxu0 0.0
        %1050 = vmatprep.subr.mxu0 0.0
        %1051 = vmatpush1.xpose.msra.mxu0 0.0
        %1052 = vmatprep.subr.mxu0 0.0
        %1053 = vmatpush1.xpose.msra.mxu0 0.0
        %1054 = vmatprep.subr.mxu0 0.0
        %1055 = vmatpush1.xpose.msra.mxu0 0.0
        %1056 = vmatprep.subr.mxu0 0.0
        %1057 = vmatpush1.xpose.msra.mxu0 0.0
        %1058 = vmatprep.subr.mxu0 0.0
        %1059 = vmatpush1.xpose.msra.mxu0 0.0
        %1060 = vmatprep.subr.mxu0 0.0
        %1061 = vmatpush1.xpose.msra.mxu0 0.0
        %1062 = vmatprep.subr.mxu0 0.0
        %1063 = vmatpush1.xpose.msra.mxu0 0.0
        %1064 = vmatprep.subr.mxu0 0.0
        %1065 = vmatpush1.xpose.msra.mxu0 0.0
        %1066 = vmatprep.subr.mxu0 0.0
        %1067 = vmatpush1.xpose.msra.mxu0 0.0
        %1068 = vmatprep.subr.mxu0 0.0
        %1069 = vmatpush1.xpose.msra.mxu0 0.0
        %1070 = vmatprep.subr.mxu0 0.0
        %1071 = vmatpush1.xpose.msra.mxu0 0.0
        %1072 = vmatprep.subr.mxu0 0.0
        %1073 = vmatpush1.xpose.msra.mxu0 0.0
        %1074 = vmatprep.subr.mxu0 0.0
        %1075 = vmatpush1.xpose.msra.mxu0 0.0
        %1076 = vmatprep.subr.mxu0 0.0
        %1077 = vmatpush1.xpose.msra.mxu0 0.0
        %1078 = vmatprep.subr.mxu0 0.0
        %1079 = vmatpush1.xpose.msra.mxu0 0.0
        %1080 = vmatprep.subr.mxu0 0.0
        %1081 = vmatpush1.xpose.msra.mxu0 0.0
        %1082 = vmatprep.mubr.f32.mxu0 0.0
        %1083 = vmatmul.mubr.f32.gmra.mrb[0].mxu0 %v1014
        %v1084 = vpop.f32.mrb[0].mxu0
        %v1085 = vadd.f32 0.0, %v1084
        %v1086 = vpop.f32.mrb[0].mxu0
        %1087 = vdwg.mxu0
        %v1088 = vsub.f32 %v1085, %v843
        %v1089 = vsel %vm844, %v1088, -inf
        %1090 = vmax.xlane.f32.xlu0 %v1089
        %v1091 = vpop.xlane.xlu0 %1090
        %v1092 = vsub.f32 %v1088, %v1091
        %v1093 = vmul.f32 %v1092, 1.442695
        %v1094 = vpow.pop %v1093
        %v1095 = vsel %vm844, %v1094, 0.0
        %1096 = vadd.xlane.f32.xlu0 %v1095
        %v1097 = vpop.xlane.xlu0 %1096
        %v1098 = vrcp.pop %v1097
        %v1099 = vmul.f32 %v1094, %v1098
        %1100 = vrot.lane.b32.xlu0 %v840, 88
        %v1101 = vpop.permute.xlu0 %1100
        %v1104 = vsel %vm844, %v1099, 0
        %1106 = vmatprep.subr.mxu0 0.0
        %1107 = vmatpush1.msra.mxu0 %v1101
        %1108 = vmatprep.subr.mxu0 0.0
        %1109 = vmatpush1.msra.mxu0 0.0
        %1110 = vmatprep.subr.mxu0 0.0
        %1111 = vmatpush1.msra.mxu0 0.0
        %1112 = vmatprep.subr.mxu0 0.0
        %1113 = vmatpush1.msra.mxu0 0.0
        %1114 = vmatprep.subr.mxu0 0.0
        %1115 = vmatpush1.msra.mxu0 0.0
        %1116 = vmatprep.subr.mxu0 0.0
        %1117 = vmatpush1.msra.mxu0 0.0
        %1118 = vmatprep.subr.mxu0 0.0
        %1119 = vmatpush1.msra.mxu0 0.0
        %1120 = vmatprep.subr.mxu0 0.0
        %1121 = vmatpush1.msra.mxu0 0.0
        %1122 = vmatprep.subr.mxu0 0.0
        %1123 = vmatpush1.msra.mxu0 0.0
        %1124 = vmatprep.subr.mxu0 0.0
        %1125 = vmatpush1.msra.mxu0 0.0
        %1126 = vmatprep.subr.mxu0 0.0
        %1127 = vmatpush1.msra.mxu0 0.0
        %1128 = vmatprep.subr.mxu0 0.0
        %1129 = vmatpush1.msra.mxu0 0.0
        %1130 = vmatprep.subr.mxu0 0.0
        %1131 = vmatpush1.msra.mxu0 0.0
        %1132 = vmatprep.subr.mxu0 0.0
        %1133 = vmatpush1.msra.mxu0 0.0
        %1134 = vmatprep.subr.mxu0 0.0
        %1135 = vmatpush1.msra.mxu0 0.0
        %1136 = vmatprep.subr.mxu0 0.0
        %1137 = vmatpush1.msra.mxu0 0.0
        %1138 = vmatprep.subr.mxu0 0.0
        %1139 = vmatpush1.msra.mxu0 0.0
        %1140 = vmatprep.subr.mxu0 0.0
        %1141 = vmatpush1.msra.mxu0 0.0
        %1142 = vmatprep.subr.mxu0 0.0
        %1143 = vmatpush1.msra.mxu0 0.0
        %1144 = vmatprep.subr.mxu0 0.0
        %1145 = vmatpush1.msra.mxu0 0.0
        %1146 = vmatprep.subr.mxu0 0.0
        %1147 = vmatpush1.msra.mxu0 0.0
        %1148 = vmatprep.subr.mxu0 0.0
        %1149 = vmatpush1.msra.mxu0 0.0
        %1150 = vmatprep.subr.mxu0 0.0
        %1151 = vmatpush1.msra.mxu0 0.0
        %1152 = vmatprep.subr.mxu0 0.0
        %1153 = vmatpush1.msra.mxu0 0.0
        %1154 = vmatprep.subr.mxu0 0.0
        %1155 = vmatpush1.msra.mxu0 0.0
        %1156 = vmatprep.subr.mxu0 0.0
        %1157 = vmatpush1.msra.mxu0 0.0
        %1158 = vmatprep.subr.mxu0 0.0
        %1159 = vmatpush1.msra.mxu0 0.0
        %1160 = vmatprep.subr.mxu0 0.0
        %1161 = vmatpush1.msra.mxu0 0.0
        %1162 = vmatprep.subr.mxu0 0.0
        %1163 = vmatpush1.msra.mxu0 0.0
        %1164 = vmatprep.subr.mxu0 0.0
        %1165 = vmatpush1.msra.mxu0 0.0
        %1166 = vmatprep.subr.mxu0 0.0
        %1167 = vmatpush1.msra.mxu0 0.0
        %1168 = vmatprep.subr.mxu0 0.0
        %1169 = vmatpush1.msra.mxu0 0.0
        %1170 = vmatprep.mubr.f32.mxu0 0.0
        %1171 = vmatmul.mubr.f32.gmra.mrb[0].mxu0 %v1104
        %v1172 = vpop.f32.mrb[0].mxu0
        %v1173 = vadd.f32 0.0, %v1172
        %v1174 = vpop.f32.mrb[0].mxu0
        %1175 = vdwg.mxu0
        %1177 = vrot.lane.b32.xlu0 %v1173, 8
        %v1178 = vpop.permute.xlu0 %1177
        %vm1180 = vcmask 130112
        %1181 = vst.msk [vmem:[#allocation2] sm:$0xff] %vm1180, %v1178
        %1182 = vrot.lane.b32.xlu0 %v763, 112
        %v1183 = vpop.permute.xlu0 %1182
        %1184 = vrot.lane.b32.xlu0 %v840, 112
        %v1185 = vpop.permute.xlu0 %1184
        %v1186 = vsel %vm844, %v1183, 0
        %v1188 = vsel %vm844, %v1185, 0
        %1190 = vmatprep.subr.mxu0 0.0
        %1191 = vmatpush1.xpose.msra.mxu0 %v1188
        %1192 = vmatprep.subr.mxu0 0.0
        %1193 = vmatpush1.xpose.msra.mxu0 0.0
        %1194 = vmatprep.subr.mxu0 0.0
        %1195 = vmatpush1.xpose.msra.mxu0 0.0
        %1196 = vmatprep.subr.mxu0 0.0
        %1197 = vmatpush1.xpose.msra.mxu0 0.0
        %1198 = vmatprep.subr.mxu0 0.0
        %1199 = vmatpush1.xpose.msra.mxu0 0.0
        %1200 = vmatprep.subr.mxu0 0.0
        %1201 = vmatpush1.xpose.msra.mxu0 0.0
        %1202 = vmatprep.subr.mxu0 0.0
        %1203 = vmatpush1.xpose.msra.mxu0 0.0
        %1204 = vmatprep.subr.mxu0 0.0
        %1205 = vmatpush1.xpose.msra.mxu0 0.0
        %1206 = vmatprep.subr.mxu0 0.0
        %1207 = vmatpush1.xpose.msra.mxu0 0.0
        %1208 = vmatprep.subr.mxu0 0.0
        %1209 = vmatpush1.xpose.msra.mxu0 0.0
        %1210 = vmatprep.subr.mxu0 0.0
        %1211 = vmatpush1.xpose.msra.mxu0 0.0
        %1212 = vmatprep.subr.mxu0 0.0
        %1213 = vmatpush1.xpose.msra.mxu0 0.0
        %1214 = vmatprep.subr.mxu0 0.0
        %1215 = vmatpush1.xpose.msra.mxu0 0.0
        %1216 = vmatprep.subr.mxu0 0.0
        %1217 = vmatpush1.xpose.msra.mxu0 0.0
        %1218 = vmatprep.subr.mxu0 0.0
        %1219 = vmatpush1.xpose.msra.mxu0 0.0
        %1220 = vmatprep.subr.mxu0 0.0
        %1221 = vmatpush1.xpose.msra.mxu0 0.0
        %1222 = vmatprep.subr.mxu0 0.0
        %1223 = vmatpush1.xpose.msra.mxu0 0.0
        %1224 = vmatprep.subr.mxu0 0.0
        %1225 = vmatpush1.xpose.msra.mxu0 0.0
        %1226 = vmatprep.subr.mxu0 0.0
        %1227 = vmatpush1.xpose.msra.mxu0 0.0
        %1228 = vmatprep.subr.mxu0 0.0
        %1229 = vmatpush1.xpose.msra.mxu0 0.0
        %1230 = vmatprep.subr.mxu0 0.0
        %1231 = vmatpush1.xpose.msra.mxu0 0.0
        %1232 = vmatprep.subr.mxu0 0.0
        %1233 = vmatpush1.xpose.msra.mxu0 0.0
        %1234 = vmatprep.subr.mxu0 0.0
        %1235 = vmatpush1.xpose.msra.mxu0 0.0
        %1236 = vmatprep.subr.mxu0 0.0
        %1237 = vmatpush1.xpose.msra.mxu0 0.0
        %1238 = vmatprep.subr.mxu0 0.0
        %1239 = vmatpush1.xpose.msra.mxu0 0.0
        %1240 = vmatprep.subr.mxu0 0.0
        %1241 = vmatpush1.xpose.msra.mxu0 0.0
        %1242 = vmatprep.subr.mxu0 0.0
        %1243 = vmatpush1.xpose.msra.mxu0 0.0
        %1244 = vmatprep.subr.mxu0 0.0
        %1245 = vmatpush1.xpose.msra.mxu0 0.0
        %1246 = vmatprep.subr.mxu0 0.0
        %1247 = vmatpush1.xpose.msra.mxu0 0.0
        %1248 = vmatprep.subr.mxu0 0.0
        %1249 = vmatpush1.xpose.msra.mxu0 0.0
        %1250 = vmatprep.subr.mxu0 0.0
        %1251 = vmatpush1.xpose.msra.mxu0 0.0
        %1252 = vmatprep.subr.mxu0 0.0
        %1253 = vmatpush1.xpose.msra.mxu0 0.0
        %1254 = vmatprep.mubr.f32.mxu0 0.0
        %1255 = vmatmul.mubr.f32.gmra.mrb[0].mxu0 %v1186
        %v1256 = vpop.f32.mrb[0].mxu0
        %v1257 = vadd.f32 0.0, %v1256
        %v1258 = vpop.f32.mrb[0].mxu0
        %1259 = vdwg.mxu0
        %v1260 = vsub.f32 %v1257, %v843
        %v1261 = vsel %vm844, %v1260, -inf
        %1262 = vmax.xlane.f32.xlu0 %v1261
        %v1263 = vpop.xlane.xlu0 %1262
        %v1264 = vsub.f32 %v1260, %v1263
        %v1265 = vmul.f32 %v1264, 1.442695
        %v1266 = vpow.pop %v1265
        %v1267 = vsel %vm844, %v1266, 0.0
        %1268 = vadd.xlane.f32.xlu0 %v1267
        %v1269 = vpop.xlane.xlu0 %1268
        %v1270 = vrcp.pop %v1269
        %v1271 = vmul.f32 %v1266, %v1270
        %1272 = vrot.lane.b32.xlu0 %v840, 80
        %v1273 = vpop.permute.xlu0 %1272
        %v1276 = vsel %vm844, %v1271, 0
        %1278 = vmatprep.subr.mxu0 0.0
        %1279 = vmatpush1.msra.mxu0 %v1273
        %1280 = vmatprep.subr.mxu0 0.0
        %1281 = vmatpush1.msra.mxu0 0.0
        %1282 = vmatprep.subr.mxu0 0.0
        %1283 = vmatpush1.msra.mxu0 0.0
        %1284 = vmatprep.subr.mxu0 0.0
        %1285 = vmatpush1.msra.mxu0 0.0
        %1286 = vmatprep.subr.mxu0 0.0
        %1287 = vmatpush1.msra.mxu0 0.0
        %1288 = vmatprep.subr.mxu0 0.0
        %1289 = vmatpush1.msra.mxu0 0.0
        %1290 = vmatprep.subr.mxu0 0.0
        %1291 = vmatpush1.msra.mxu0 0.0
        %1292 = vmatprep.subr.mxu0 0.0
        %1293 = vmatpush1.msra.mxu0 0.0
        %1294 = vmatprep.subr.mxu0 0.0
        %1295 = vmatpush1.msra.mxu0 0.0
        %1296 = vmatprep.subr.mxu0 0.0
        %1297 = vmatpush1.msra.mxu0 0.0
        %1298 = vmatprep.subr.mxu0 0.0
        %1299 = vmatpush1.msra.mxu0 0.0
        %1300 = vmatprep.subr.mxu0 0.0
        %1301 = vmatpush1.msra.mxu0 0.0
        %1302 = vmatprep.subr.mxu0 0.0
        %1303 = vmatpush1.msra.mxu0 0.0
        %1304 = vmatprep.subr.mxu0 0.0
        %1305 = vmatpush1.msra.mxu0 0.0
        %1306 = vmatprep.subr.mxu0 0.0
        %1307 = vmatpush1.msra.mxu0 0.0
        %1308 = vmatprep.subr.mxu0 0.0
        %1309 = vmatpush1.msra.mxu0 0.0
        %1310 = vmatprep.subr.mxu0 0.0
        %1311 = vmatpush1.msra.mxu0 0.0
        %1312 = vmatprep.subr.mxu0 0.0
        %1313 = vmatpush1.msra.mxu0 0.0
        %1314 = vmatprep.subr.mxu0 0.0
        %1315 = vmatpush1.msra.mxu0 0.0
        %1316 = vmatprep.subr.mxu0 0.0
        %1317 = vmatpush1.msra.mxu0 0.0
        %1318 = vmatprep.subr.mxu0 0.0
        %1319 = vmatpush1.msra.mxu0 0.0
        %1320 = vmatprep.subr.mxu0 0.0
        %1321 = vmatpush1.msra.mxu0 0.0
        %1322 = vmatprep.subr.mxu0 0.0
        %1323 = vmatpush1.msra.mxu0 0.0
        %1324 = vmatprep.subr.mxu0 0.0
        %1325 = vmatpush1.msra.mxu0 0.0
        %1326 = vmatprep.subr.mxu0 0.0
        %1327 = vmatpush1.msra.mxu0 0.0
        %1328 = vmatprep.subr.mxu0 0.0
        %1329 = vmatpush1.msra.mxu0 0.0
        %1330 = vmatprep.subr.mxu0 0.0
        %1331 = vmatpush1.msra.mxu0 0.0
        %1332 = vmatprep.subr.mxu0 0.0
        %1333 = vmatpush1.msra.mxu0 0.0
        %1334 = vmatprep.subr.mxu0 0.0
        %1335 = vmatpush1.msra.mxu0 0.0
        %1336 = vmatprep.subr.mxu0 0.0
        %1337 = vmatpush1.msra.mxu0 0.0
        %1338 = vmatprep.subr.mxu0 0.0
        %1339 = vmatpush1.msra.mxu0 0.0
        %1340 = vmatprep.subr.mxu0 0.0
        %1341 = vmatpush1.msra.mxu0 0.0
        %1342 = vmatprep.mubr.f32.mxu0 0.0
        %1343 = vmatmul.mubr.f32.gmra.mrb[0].mxu0 %v1276
        %v1344 = vpop.f32.mrb[0].mxu0
        %v1345 = vadd.f32 0.0, %v1344
        %v1346 = vpop.f32.mrb[0].mxu0
        %1347 = vdwg.mxu0
        %1349 = vrot.lane.b32.xlu0 %v1345, 16
        %v1350 = vpop.permute.xlu0 %1349
        %vm1352 = vcmask 195712
        %1353 = vst.msk [vmem:[#allocation2] sm:$0xff] %vm1352, %v1350
        %1354 = vrot.lane.b32.xlu0 %v763, 104
        %v1355 = vpop.permute.xlu0 %1354
        %1356 = vrot.lane.b32.xlu0 %v840, 104
        %v1357 = vpop.permute.xlu0 %1356
        %v1358 = vsel %vm844, %v1355, 0
        %v1360 = vsel %vm844, %v1357, 0
        %1362 = vmatprep.subr.mxu0 0.0
        %1363 = vmatpush1.xpose.msra.mxu0 %v1360
        %1364 = vmatprep.subr.mxu0 0.0
        %1365 = vmatpush1.xpose.msra.mxu0 0.0
        %1366 = vmatprep.subr.mxu0 0.0
        %1367 = vmatpush1.xpose.msra.mxu0 0.0
        %1368 = vmatprep.subr.mxu0 0.0
        %1369 = vmatpush1.xpose.msra.mxu0 0.0
        %1370 = vmatprep.subr.mxu0 0.0
        %1371 = vmatpush1.xpose.msra.mxu0 0.0
        %1372 = vmatprep.subr.mxu0 0.0
        %1373 = vmatpush1.xpose.msra.mxu0 0.0
        %1374 = vmatprep.subr.mxu0 0.0
        %1375 = vmatpush1.xpose.msra.mxu0 0.0
        %1376 = vmatprep.subr.mxu0 0.0
        %1377 = vmatpush1.xpose.msra.mxu0 0.0
        %1378 = vmatprep.subr.mxu0 0.0
        %1379 = vmatpush1.xpose.msra.mxu0 0.0
        %1380 = vmatprep.subr.mxu0 0.0
        %1381 = vmatpush1.xpose.msra.mxu0 0.0
        %1382 = vmatprep.subr.mxu0 0.0
        %1383 = vmatpush1.xpose.msra.mxu0 0.0
        %1384 = vmatprep.subr.mxu0 0.0
        %1385 = vmatpush1.xpose.msra.mxu0 0.0
        %1386 = vmatprep.subr.mxu0 0.0
        %1387 = vmatpush1.xpose.msra.mxu0 0.0
        %1388 = vmatprep.subr.mxu0 0.0
        %1389 = vmatpush1.xpose.msra.mxu0 0.0
        %1390 = vmatprep.subr.mxu0 0.0
        %1391 = vmatpush1.xpose.msra.mxu0 0.0
        %1392 = vmatprep.subr.mxu0 0.0
        %1393 = vmatpush1.xpose.msra.mxu0 0.0
        %1394 = vmatprep.subr.mxu0 0.0
        %1395 = vmatpush1.xpose.msra.mxu0 0.0
        %1396 = vmatprep.subr.mxu0 0.0
        %1397 = vmatpush1.xpose.msra.mxu0 0.0
        %1398 = vmatprep.subr.mxu0 0.0
        %1399 = vmatpush1.xpose.msra.mxu0 0.0
        %1400 = vmatprep.subr.mxu0 0.0
        %1401 = vmatpush1.xpose.msra.mxu0 0.0
        %1402 = vmatprep.subr.mxu0 0.0
        %1403 = vmatpush1.xpose.msra.mxu0 0.0
        %1404 = vmatprep.subr.mxu0 0.0
        %1405 = vmatpush1.xpose.msra.mxu0 0.0
        %1406 = vmatprep.subr.mxu0 0.0
        %1407 = vmatpush1.xpose.msra.mxu0 0.0
        %1408 = vmatprep.subr.mxu0 0.0
        %1409 = vmatpush1.xpose.msra.mxu0 0.0
        %1410 = vmatprep.subr.mxu0 0.0
        %1411 = vmatpush1.xpose.msra.mxu0 0.0
        %1412 = vmatprep.subr.mxu0 0.0
        %1413 = vmatpush1.xpose.msra.mxu0 0.0
        %1414 = vmatprep.subr.mxu0 0.0
        %1415 = vmatpush1.xpose.msra.mxu0 0.0
        %1416 = vmatprep.subr.mxu0 0.0
        %1417 = vmatpush1.xpose.msra.mxu0 0.0
        %1418 = vmatprep.subr.mxu0 0.0
        %1419 = vmatpush1.xpose.msra.mxu0 0.0
        %1420 = vmatprep.subr.mxu0 0.0
        %1421 = vmatpush1.xpose.msra.mxu0 0.0
        %1422 = vmatprep.subr.mxu0 0.0
        %1423 = vmatpush1.xpose.msra.mxu0 0.0
        %1424 = vmatprep.subr.mxu0 0.0
        %1425 = vmatpush1.xpose.msra.mxu0 0.0
        %1426 = vmatprep.mubr.f32.mxu0 0.0
        %1427 = vmatmul.mubr.f32.gmra.mrb[0].mxu0 %v1358
        %v1428 = vpop.f32.mrb[0].mxu0
        %v1429 = vadd.f32 0.0, %v1428
        %v1430 = vpop.f32.mrb[0].mxu0
        %1431 = vdwg.mxu0
        %v1432 = vsub.f32 %v1429, %v843
        %v1433 = vsel %vm844, %v1432, -inf
        %1434 = vmax.xlane.f32.xlu0 %v1433
        %v1435 = vpop.xlane.xlu0 %1434
        %v1436 = vsub.f32 %v1432, %v1435
        %v1437 = vmul.f32 %v1436, 1.442695
        %v1438 = vpow.pop %v1437
        %v1439 = vsel %vm844, %v1438, 0.0
        %1440 = vadd.xlane.f32.xlu0 %v1439
        %v1441 = vpop.xlane.xlu0 %1440
        %v1442 = vrcp.pop %v1441
        %v1443 = vmul.f32 %v1438, %v1442
        %1444 = vrot.lane.b32.xlu0 %v840, 72
        %v1445 = vpop.permute.xlu0 %1444
        %v1448 = vsel %vm844, %v1443, 0
        %1450 = vmatprep.subr.mxu0 0.0
        %1451 = vmatpush1.msra.mxu0 %v1445
        %1452 = vmatprep.subr.mxu0 0.0
        %1453 = vmatpush1.msra.mxu0 0.0
        %1454 = vmatprep.subr.mxu0 0.0
        %1455 = vmatpush1.msra.mxu0 0.0
        %1456 = vmatprep.subr.mxu0 0.0
        %1457 = vmatpush1.msra.mxu0 0.0
        %1458 = vmatprep.subr.mxu0 0.0
        %1459 = vmatpush1.msra.mxu0 0.0
        %1460 = vmatprep.subr.mxu0 0.0
        %1461 = vmatpush1.msra.mxu0 0.0
        %1462 = vmatprep.subr.mxu0 0.0
        %1463 = vmatpush1.msra.mxu0 0.0
        %1464 = vmatprep.subr.mxu0 0.0
        %1465 = vmatpush1.msra.mxu0 0.0
        %1466 = vmatprep.subr.mxu0 0.0
        %1467 = vmatpush1.msra.mxu0 0.0
        %1468 = vmatprep.subr.mxu0 0.0
        %1469 = vmatpush1.msra.mxu0 0.0
        %1470 = vmatprep.subr.mxu0 0.0
        %1471 = vmatpush1.msra.mxu0 0.0
        %1472 = vmatprep.subr.mxu0 0.0
        %1473 = vmatpush1.msra.mxu0 0.0
        %1474 = vmatprep.subr.mxu0 0.0
        %1475 = vmatpush1.msra.mxu0 0.0
        %1476 = vmatprep.subr.mxu0 0.0
        %1477 = vmatpush1.msra.mxu0 0.0
        %1478 = vmatprep.subr.mxu0 0.0
        %1479 = vmatpush1.msra.mxu0 0.0
        %1480 = vmatprep.subr.mxu0 0.0
        %1481 = vmatpush1.msra.mxu0 0.0
        %1482 = vmatprep.subr.mxu0 0.0
        %1483 = vmatpush1.msra.mxu0 0.0
        %1484 = vmatprep.subr.mxu0 0.0
        %1485 = vmatpush1.msra.mxu0 0.0
        %1486 = vmatprep.subr.mxu0 0.0
        %1487 = vmatpush1.msra.mxu0 0.0
        %1488 = vmatprep.subr.mxu0 0.0
        %1489 = vmatpush1.msra.mxu0 0.0
        %1490 = vmatprep.subr.mxu0 0.0
        %1491 = vmatpush1.msra.mxu0 0.0
        %1492 = vmatprep.subr.mxu0 0.0
        %1493 = vmatpush1.msra.mxu0 0.0
        %1494 = vmatprep.subr.mxu0 0.0
        %1495 = vmatpush1.msra.mxu0 0.0
        %1496 = vmatprep.subr.mxu0 0.0
        %1497 = vmatpush1.msra.mxu0 0.0
        %1498 = vmatprep.subr.mxu0 0.0
        %1499 = vmatpush1.msra.mxu0 0.0
        %1500 = vmatprep.subr.mxu0 0.0
        %1501 = vmatpush1.msra.mxu0 0.0
        %1502 = vmatprep.subr.mxu0 0.0
        %1503 = vmatpush1.msra.mxu0 0.0
        %1504 = vmatprep.subr.mxu0 0.0
        %1505 = vmatpush1.msra.mxu0 0.0
        %1506 = vmatprep.subr.mxu0 0.0
        %1507 = vmatpush1.msra.mxu0 0.0
        %1508 = vmatprep.subr.mxu0 0.0
        %1509 = vmatpush1.msra.mxu0 0.0
        %1510 = vmatprep.subr.mxu0 0.0
        %1511 = vmatpush1.msra.mxu0 0.0
        %1512 = vmatprep.subr.mxu0 0.0
        %1513 = vmatpush1.msra.mxu0 0.0
        %1514 = vmatprep.mubr.f32.mxu0 0.0
        %1515 = vmatmul.mubr.f32.gmra.mrb[0].mxu0 %v1448
        %v1516 = vpop.f32.mrb[0].mxu0
        %v1517 = vadd.f32 0.0, %v1516
        %v1518 = vpop.f32.mrb[0].mxu0
        %1519 = vdwg.mxu0
        %1521 = vrot.lane.b32.xlu0 %v1517, 24
        %v1522 = vpop.permute.xlu0 %1521
        %vm1524 = vcmask 261312
        %1525 = vst.msk [vmem:[#allocation2] sm:$0xff] %vm1524, %v1522
        %v1526 = vld [vmem:[#allocation2] sm:$0xff]
        %v1527 = vld [vmem:[#allocation12] sm:$0xff]
        %v1528 = vld [vmem:[#allocation12 + $0x8] sm:$0xff]
        %v1529 = vld [vmem:[#allocation12 + $0x10] sm:$0xff]
        %v1530 = vld [vmem:[#allocation12 + $0x18] sm:$0xff]
        %v1532 = vsel %vm692, %v1526, 0
        %1534 = vmatprep.subr.mxu0 0.0
        %1535 = vmatpush1.msra.mxu0 %v1527
        %1536 = vmatprep.subr.mxu0 0.0
        %1537 = vmatpush1.msra.mxu0 %v1528
        %1538 = vmatprep.subr.mxu0 0.0
        %1539 = vmatpush1.msra.mxu0 %v1529
        %1540 = vmatprep.subr.mxu0 0.0
        %1541 = vmatpush1.msra.mxu0 %v1530
        %1542 = vmatprep.subr.mxu0 0.0
        %1543 = vmatpush1.msra.mxu0 0.0
        %1544 = vmatprep.subr.mxu0 0.0
        %1545 = vmatpush1.msra.mxu0 0.0
        %1546 = vmatprep.subr.mxu0 0.0
        %1547 = vmatpush1.msra.mxu0 0.0
        %1548 = vmatprep.subr.mxu0 0.0
        %1549 = vmatpush1.msra.mxu0 0.0
        %1550 = vmatprep.subr.mxu0 0.0
        %1551 = vmatpush1.msra.mxu0 0.0
        %1552 = vmatprep.subr.mxu0 0.0
        %1553 = vmatpush1.msra.mxu0 0.0
        %1554 = vmatprep.subr.mxu0 0.0
        %1555 = vmatpush1.msra.mxu0 0.0
        %1556 = vmatprep.subr.mxu0 0.0
        %1557 = vmatpush1.msra.mxu0 0.0
        %1558 = vmatprep.subr.mxu0 0.0
        %1559 = vmatpush1.msra.mxu0 0.0
        %1560 = vmatprep.subr.mxu0 0.0
        %1561 = vmatpush1.msra.mxu0 0.0
        %1562 = vmatprep.subr.mxu0 0.0
        %1563 = vmatpush1.msra.mxu0 0.0
        %1564 = vmatprep.subr.mxu0 0.0
        %1565 = vmatpush1.msra.mxu0 0.0
        %1566 = vmatprep.subr.mxu0 0.0
        %1567 = vmatpush1.msra.mxu0 0.0
        %1568 = vmatprep.subr.mxu0 0.0
        %1569 = vmatpush1.msra.mxu0 0.0
        %1570 = vmatprep.subr.mxu0 0.0
        %1571 = vmatpush1.msra.mxu0 0.0
        %1572 = vmatprep.subr.mxu0 0.0
        %1573 = vmatpush1.msra.mxu0 0.0
        %1574 = vmatprep.subr.mxu0 0.0
        %1575 = vmatpush1.msra.mxu0 0.0
        %1576 = vmatprep.subr.mxu0 0.0
        %1577 = vmatpush1.msra.mxu0 0.0
        %1578 = vmatprep.subr.mxu0 0.0
        %1579 = vmatpush1.msra.mxu0 0.0
        %1580 = vmatprep.subr.mxu0 0.0
        %1581 = vmatpush1.msra.mxu0 0.0
        %1582 = vmatprep.subr.mxu0 0.0
        %1583 = vmatpush1.msra.mxu0 0.0
        %1584 = vmatprep.subr.mxu0 0.0
        %1585 = vmatpush1.msra.mxu0 0.0
        %1586 = vmatprep.subr.mxu0 0.0
        %1587 = vmatpush1.msra.mxu0 0.0
        %1588 = vmatprep.subr.mxu0 0.0
        %1589 = vmatpush1.msra.mxu0 0.0
        %1590 = vmatprep.subr.mxu0 0.0
        %1591 = vmatpush1.msra.mxu0 0.0
        %1592 = vmatprep.subr.mxu0 0.0
        %1593 = vmatpush1.msra.mxu0 0.0
        %1594 = vmatprep.subr.mxu0 0.0
        %1595 = vmatpush1.msra.mxu0 0.0
        %1596 = vmatprep.subr.mxu0 0.0
        %1597 = vmatpush1.msra.mxu0 0.0
        %1598 = vmatprep.mubr.f32.mxu0 0.0
        %1599 = vmatmul.mubr.f32.gmra.mrb[0].mxu0 %v1532
        %v1600 = vpop.f32.mrb[0].mxu0
        %v1601 = vadd.f32 0.0, %v1600
        %v1602 = vpop.f32.mrb[0].mxu0
        %1603 = vdwg.mxu0
        %v1604 = vadd.f32 %v686, %v1601
        %v1605 = vld [vmem:[%s6] sm:$0x1]
        %v1606 = vld [vmem:[%s7] sm:$0x1]
        %v1607 = vsel %vm692, %v1604, 0.0
        %1608 = vadd.xlane.f32.xlu0 %v1607
        %v1609 = vpop.xlane.xlu0 %1608
        %v1610 = vrcp.pop 32.0
        %v1611 = vmul.f32 %v1609, %v1610
        %v1612 = vsub.f32 %v1604, %v1611
        %v1613 = vmul.f32 %v1612, %v1612
        %v1614 = vsel %vm692, %v1613, 0.0
        %1615 = vadd.xlane.f32.xlu0 %v1614
        %v1616 = vpop.xlane.xlu0 %1615
        %v1617 = vmul.f32 %v1616, %v1610
        %v1618 = vadd.f32 %v1617, 1e-05
        %v1619 = vrsqrt.pop %v1618
        %v1620 = vmul.f32 %v1612, %v1619
        %v1622 = vlaneseq
        %v1623 = vshrl.u32 %v1622, 7
        %v1624 = vsub.s32 0, %v1623
        %v1625 = vrot.slane %v1605, %v1624
        %v1627 = vmul.f32 %v1620, %v1625
        %v1629 = vlaneseq
        %v1630 = vshrl.u32 %v1629, 7
        %v1631 = vsub.s32 0, %v1630
        %v1632 = vrot.slane %v1606, %v1631
        %v1634 = vadd.f32 %v1627, %v1632
        %v1635 = vld [vmem:[%s8] sm:$0x1]
        %v1636 = vld [vmem:[%s9] sm:$0x1]
        %v1637 = vsel %vm692, %v1634, 0.0
        %1638 = vadd.xlane.f32.xlu0 %v1637
        %v1639 = vpop.xlane.xlu0 %1638
        %v1640 = vmul.f32 %v1639, %v1610
        %v1641 = vsub.f32 %v1634, %v1640
        %v1642 = vmul.f32 %v1641, %v1641
        %v1643 = vsel %vm692, %v1642, 0.0
        %1644 = vadd.xlane.f32.xlu0 %v1643
        %v1645 = vpop.xlane.xlu0 %1644
        %v1646 = vmul.f32 %v1645, %v1610
        %v1647 = vadd.f32 %v1646, 1e-05
        %v1648 = vrsqrt.pop %v1647
        %v1649 = vmul.f32 %v1641, %v1648
        %v1651 = vlaneseq
        %v1652 = vshrl.u32 %v1651, 7
        %v1653 = vsub.s32 0, %v1652
        %v1654 = vrot.slane %v1635, %v1653
        %v1656 = vmul.f32 %v1649, %v1654
        %v1658 = vlaneseq
        %v1659 = vshrl.u32 %v1658, 7
        %v1660 = vsub.s32 0, %v1659
        %v1661 = vrot.slane %v1636, %v1660
        %v1663 = vadd.f32 %v1656, %v1661
        %v1664 = vld [vmem:[%s10] sm:$0xff]
        %v1665 = vld [vmem:[%s10 + $0x8] sm:$0xff]
        %v1666 = vld [vmem:[%s10 + $0x10] sm:$0xff]
        %v1667 = vld [vmem:[%s10 + $0x18] sm:$0xff]
        %v1669 = vsel %vm692, %v1663, 0
        %1671 = vmatprep.subr.mxu0 0.0
        %1672 = vmatpush1.msra.mxu0 %v1664
        %1673 = vmatprep.subr.mxu0 0.0
        %1674 = vmatpush1.msra.mxu0 %v1665
        %1675 = vmatprep.subr.mxu0 0.0
        %1676 = vmatpush1.msra.mxu0 %v1666
        %1677 = vmatprep.subr.mxu0 0.0
        %1678 = vmatpush1.msra.mxu0 %v1667
        %1679 = vmatprep.subr.mxu0 0.0
        %1680 = vmatpush1.msra.mxu0 0.0
        %1681 = vmatprep.subr.mxu0 0.0
        %1682 = vmatpush1.msra.mxu0 0.0
        %1683 = vmatprep.subr.mxu0 0.0
        %1684 = vmatpush1.msra.mxu0 0.0
        %1685 = vmatprep.subr.mxu0 0.0
        %1686 = vmatpush1.msra.mxu0 0.0
        %1687 = vmatprep.subr.mxu0 0.0
        %1688 = vmatpush1.msra.mxu0 0.0
        %1689 = vmatprep.subr.mxu0 0.0
        %1690 = vmatpush1.msra.mxu0 0.0
        %1691 = vmatprep.subr.mxu0 0.0
        %1692 = vmatpush1.msra.mxu0 0.0
        %1693 = vmatprep.subr.mxu0 0.0
        %1694 = vmatpush1.msra.mxu0 0.0
        %1695 = vmatprep.subr.mxu0 0.0
        %1696 = vmatpush1.msra.mxu0 0.0
        %1697 = vmatprep.subr.mxu0 0.0
        %1698 = vmatpush1.msra.mxu0 0.0
        %1699 = vmatprep.subr.mxu0 0.0
        %1700 = vmatpush1.msra.mxu0 0.0
        %1701 = vmatprep.subr.mxu0 0.0
        %1702 = vmatpush1.msra.mxu0 0.0
        %1703 = vmatprep.subr.mxu0 0.0
        %1704 = vmatpush1.msra.mxu0 0.0
        %1705 = vmatprep.subr.mxu0 0.0
        %1706 = vmatpush1.msra.mxu0 0.0
        %1707 = vmatprep.subr.mxu0 0.0
        %1708 = vmatpush1.msra.mxu0 0.0
        %1709 = vmatprep.subr.mxu0 0.0
        %1710 = vmatpush1.msra.mxu0 0.0
        %1711 = vmatprep.subr.mxu0 0.0
        %1712 = vmatpush1.msra.mxu0 0.0
        %1713 = vmatprep.subr.mxu0 0.0
        %1714 = vmatpush1.msra.mxu0 0.0
        %1715 = vmatprep.subr.mxu0 0.0
        %1716 = vmatpush1.msra.mxu0 0.0
        %1717 = vmatprep.subr.mxu0 0.0
        %1718 = vmatpush1.msra.mxu0 0.0
        %1719 = vmatprep.subr.mxu0 0.0
        %1720 = vmatpush1.msra.mxu0 0.0
        %1721 = vmatprep.subr.mxu0 0.0
        %1722 = vmatpush1.msra.mxu0 0.0
        %1723 = vmatprep.subr.mxu0 0.0
        %1724 = vmatpush1.msra.mxu0 0.0
        %1725 = vmatprep.subr.mxu0 0.0
        %1726 = vmatpush1.msra.mxu0 0.0
        %1727 = vmatprep.subr.mxu0 0.0
        %1728 = vmatpush1.msra.mxu0 0.0
        %1729 = vmatprep.subr.mxu0 0.0
        %1730 = vmatpush1.msra.mxu0 0.0
        %1731 = vmatprep.subr.mxu0 0.0
        %1732 = vmatpush1.msra.mxu0 0.0
        %1733 = vmatprep.subr.mxu0 0.0
        %1734 = vmatpush1.msra.mxu0 0.0
        %1735 = vmatprep.mubr.f32.mxu0 0.0
        %1736 = vmatmul.mubr.f32.gmra.mrb[0].mxu0 %v1669
        %v1737 = vpop.f32.mrb[0].mxu0
        %v1738 = vadd.f32 0.0, %v1737
        %v1739 = vpop.f32.mrb[0].mxu0
        %1740 = vdwg.mxu0
        %v1741 = vld [vmem:[%s11] sm:$0x1]
        %v1742 = vld [vmem:[%s12] sm:$0x1]
        %v1743 = vsel %vm692, %v1738, 0.0
        %1744 = vadd.xlane.f32.xlu0 %v1743
        %v1745 = vpop.xlane.xlu0 %1744
        %v1746 = vmul.f32 %v1745, %v1610
        %v1747 = vsub.f32 %v1738, %v1746
        %v1748 = vmul.f32 %v1747, %v1747
        %v1749 = vsel %vm692, %v1748, 0.0
        %1750 = vadd.xlane.f32.xlu0 %v1749
        %v1751 = vpop.xlane.xlu0 %1750
        %v1752 = vmul.f32 %v1751, %v1610
        %v1753 = vadd.f32 %v1752, 1e-05
        %v1754 = vrsqrt.pop %v1753
        %v1755 = vmul.f32 %v1747, %v1754
        %v1757 = vlaneseq
        %v1758 = vshrl.u32 %v1757, 7
        %v1759 = vsub.s32 0, %v1758
        %v1760 = vrot.slane %v1741, %v1759
        %v1762 = vmul.f32 %v1755, %v1760
        %v1764 = vlaneseq
        %v1765 = vshrl.u32 %v1764, 7
        %v1766 = vsub.s32 0, %v1765
        %v1767 = vrot.slane %v1742, %v1766
        %v1769 = vadd.f32 %v1762, %v1767
        %v1770 = vmul.f32 %v1769, 0.5
        %v1771 = vmul.f32 %v1769, 0.70710677
        %v1772 = verf.f32.pop %v1771
        %v1773 = vadd.f32 %v1772, 1.0
        %v1774 = vmul.f32 %v1770, %v1773
        %v1775 = vadd.f32 %v1663, %v1774
        %v1776 = vld [vmem:[#allocation14] sm:$0xff]
        %v1777 = vld [vmem:[#allocation14 + $0x8] sm:$0xff]
        %v1778 = vld [vmem:[#allocation14 + $0x10] sm:$0xff]
        %v1779 = vld [vmem:[#allocation14 + $0x18] sm:$0xff]
        %v1781 = vsel %vm692, %v1775, 0
        %1783 = vmatprep.subr.mxu0 0.0
        %1784 = vmatpush1.msra.mxu0 %v1776
        %1785 = vmatprep.subr.mxu0 0.0
        %1786 = vmatpush1.msra.mxu0 %v1777
        %1787 = vmatprep.subr.mxu0 0.0
        %1788 = vmatpush1.msra.mxu0 %v1778
        %1789 = vmatprep.subr.mxu0 0.0
        %1790 = vmatpush1.msra.mxu0 %v1779
        %1791 = vmatprep.subr.mxu0 0.0
        %1792 = vmatpush1.msra.mxu0 0.0
        %1793 = vmatprep.subr.mxu0 0.0
        %1794 = vmatpush1.msra.mxu0 0.0
        %1795 = vmatprep.subr.mxu0 0.0
        %1796 = vmatpush1.msra.mxu0 0.0
        %1797 = vmatprep.subr.mxu0 0.0
        %1798 = vmatpush1.msra.mxu0 0.0
        %1799 = vmatprep.subr.mxu0 0.0
        %1800 = vmatpush1.msra.mxu0 0.0
        %1801 = vmatprep.subr.mxu0 0.0
        %1802 = vmatpush1.msra.mxu0 0.0
        %1803 = vmatprep.subr.mxu0 0.0
        %1804 = vmatpush1.msra.mxu0 0.0
        %1805 = vmatprep.subr.mxu0 0.0
        %1806 = vmatpush1.msra.mxu0 0.0
        %1807 = vmatprep.subr.mxu0 0.0
        %1808 = vmatpush1.msra.mxu0 0.0
        %1809 = vmatprep.subr.mxu0 0.0
        %1810 = vmatpush1.msra.mxu0 0.0
        %1811 = vmatprep.subr.mxu0 0.0
        %1812 = vmatpush1.msra.mxu0 0.0
        %1813 = vmatprep.subr.mxu0 0.0
        %1814 = vmatpush1.msra.mxu0 0.0
        %1815 = vmatprep.subr.mxu0 0.0
        %1816 = vmatpush1.msra.mxu0 0.0
        %1817 = vmatprep.subr.mxu0 0.0
        %1818 = vmatpush1.msra.mxu0 0.0
        %1819 = vmatprep.subr.mxu0 0.0
        %1820 = vmatpush1.msra.mxu0 0.0
        %1821 = vmatprep.subr.mxu0 0.0
        %1822 = vmatpush1.msra.mxu0 0.0
        %1823 = vmatprep.subr.mxu0 0.0
        %1824 = vmatpush1.msra.mxu0 0.0
        %1825 = vmatprep.subr.mxu0 0.0
        %1826 = vmatpush1.msra.mxu0 0.0
        %1827 = vmatprep.subr.mxu0 0.0
        %1828 = vmatpush1.msra.mxu0 0.0
        %1829 = vmatprep.subr.mxu0 0.0
        %1830 = vmatpush1.msra.mxu0 0.0
        %1831 = vmatprep.subr.mxu0 0.0
        %1832 = vmatpush1.msra.mxu0 0.0
        %1833 = vmatprep.subr.mxu0 0.0
        %1834 = vmatpush1.msra.mxu0 0.0
        %1835 = vmatprep.subr.mxu0 0.0
        %1836 = vmatpush1.msra.mxu0 0.0
        %1837 = vmatprep.subr.mxu0 0.0
        %1838 = vmatpush1.msra.mxu0 0.0
        %1839 = vmatprep.subr.mxu0 0.0
        %1840 = vmatpush1.msra.mxu0 0.0
        %1841 = vmatprep.subr.mxu0 0.0
        %1842 = vmatpush1.msra.mxu0 0.0
        %1843 = vmatprep.subr.mxu0 0.0
        %1844 = vmatpush1.msra.mxu0 0.0
        %1845 = vmatprep.subr.mxu0 0.0
        %1846 = vmatpush1.msra.mxu0 0.0
        %1847 = vmatprep.mubr.f32.mxu0 0.0
        %1848 = vmatmul.mubr.f32.gmra.mrb[0].mxu0 %v1781
        %v1849 = vpop.f32.mrb[0].mxu0
        %v1850 = vadd.f32 0.0, %v1849
        %v1851 = vpop.f32.mrb[0].mxu0
        %1852 = vdwg.mxu0
        %v1853 = vld [vmem:[%s14] sm:$0x1]
        %v1854 = vld [vmem:[%s15] sm:$0x1]
        %v1855 = vsel %vm692, %v1850, 0.0
        %1856 = vadd.xlane.f32.xlu0 %v1855
        %v1857 = vpop.xlane.xlu0 %1856
        %v1858 = vmul.f32 %v1857, %v1610
        %v1859 = vsub.f32 %v1850, %v1858
        %v1860 = vmul.f32 %v1859, %v1859
        %v1861 = vsel %vm692, %v1860, 0.0
        %1862 = vadd.xlane.f32.xlu0 %v1861
        %v1863 = vpop.xlane.xlu0 %1862
        %v1864 = vmul.f32 %v1863, %v1610
        %v1865 = vadd.f32 %v1864, 1e-05
        %v1866 = vrsqrt.pop %v1865
        %v1867 = vmul.f32 %v1859, %v1866
        %v1869 = vlaneseq
        %v1870 = vshrl.u32 %v1869, 7
        %v1871 = vsub.s32 0, %v1870
        %v1872 = vrot.slane %v1853, %v1871
        %v1874 = vmul.f32 %v1867, %v1872
        %v1876 = vlaneseq
        %v1877 = vshrl.u32 %v1876, 7
        %v1878 = vsub.s32 0, %v1877
        %v1879 = vrot.slane %v1854, %v1878
        %v1881 = vadd.f32 %v1874, %v1879
        %v1882 = vmul.f32 %v1881, 0.5
        %v1883 = vmul.f32 %v1881, 0.70710677
        %v1884 = verf.f32.pop %v1883
        %v1885 = vadd.f32 %v1884, 1.0
        %v1886 = vmul.f32 %v1882, %v1885
        %v1887 = vadd.f32 %v1775, %v1886
        %1888 = vst.msk [vmem:[%s685] sm:$0xff] %vm692, %v1887
        %s1889 = sand.u32 %s415, 1
        %s1890 = scalar_lea.sflag [#allocation5], %s1889
        %s1891 = sand.u32 %s415, 1
        %s1892 = smul.addr %s1891, 8
        %s1893 = scalar_lea.vmem [#allocation15], %s1892
        // Predicated region
        $region113: #{tpu_custom_call.1} parent=83 // pred_check
          %p1894 = pneg %p425
        $region114: #{tpu_custom_call.1} parent=83 // pred_check_branch
          %1896 = sbr.rel (%p1894) target = $region116
        $region115: #{tpu_custom_call.1} parent=83 // pred_region
          %s1898 = ssub.s32 128, 128
          %1899 = vsyncadd %s1890, %s1898
          %s1900 = sadd.s32 %s43, %s42
          %s1901 = smul.addr %s1900, 128
          %s1902 = scalar_lea.hbm %s16, %s1901
          %s1904 = sshll.u32 %s1893, 4
          %s1905 = int_to_ptr.vmem [resolvable:$true] %s1904
          %1907 = dma.vmem_to_hbm [thread:$0]  %s1905, 128, %s1902, %s1890
        $region116: #{tpu_custom_call.1} parent=83 // pred_fallthru
          _
      $region84: #{tpu_custom_call.1} parent=5 // pred_fallthru
        _
      %p1908 = scmp.le.s32.totalorder 2, %s33
      // Predicated region
      $region117: #{tpu_custom_call.1} parent=5 // pred_check
        %p1909 = pneg %p1908
      $region118: #{tpu_custom_call.1} parent=5 // pred_check_branch
        %1911 = sbr.rel (%p1909) target = $region120
      $region119: #{tpu_custom_call.1} parent=5 // pred_region
        %s1912 = ssub.s32 %s33, 2
        // Predicated region
        $region121: #{tpu_custom_call.1} parent=119 // pred_check
          %p1913 = pneg %p431
        $region122: #{tpu_custom_call.1} parent=119 // pred_check_branch
          %1915 = sbr.rel (%p1913) target = $region124
        $region123: #{tpu_custom_call.1} parent=119 // pred_region
          %s1916 = sand.u32 %s416, 1
          %s1917 = scalar_lea.sflag [#allocation5], %s1916
          %s1918 = sand.u32 %s416, 1
          %s1919 = smul.addr %s1918, 8
          %s1920 = scalar_lea.vmem [#allocation15], %s1919
          %1921 = dma.done %s1917, 128
        $region124: #{tpu_custom_call.1} parent=119 // pred_fallthru
          _
      $region120: #{tpu_custom_call.1} parent=5 // pred_fallthru
        _
    $region6: #{tpu_custom_call.1} parent=1 // loop_footer
      %s37 = sadd.s32 1, %s33
    $region7: #{tpu_custom_call.1} parent=1 // loop_footer_branch
      %32 = sbr.rel target = $region3
    $region8: #{tpu_custom_call.1} parent=1 // loop_exit
      _
    %1922 = vsyncpa [#allocation4], 1
    %s1923 = scalar_lea.sflag [#allocation4], 1
    %1924 = vsyncpa %s1923, 1
    %1925 = vsyncpa [#allocation7], 1
    %s1926 = scalar_lea.sflag [#allocation7], 1
    %1927 = vsyncpa %s1926, 1
    %1928 = vsyncpa [#allocation10], 1
    %1929 = vsyncpa [#allocation13], 1
    %1930 = vsyncpa [#allocation5], 1
    %s1931 = scalar_lea.sflag [#allocation5], 1
    %1932 = vsyncpa %s1931, 1

</llo_original>
